<compile_context>
chip_gen: v5e
topology: v5e:2x2
jax: 0.10.0
libtpu: 0.0.40
codegen_flags: <defaults>
</compile_context>

<pallas_src>
import jax
import jax.numpy as jnp
from jax import lax
from jax.experimental import pallas as pl
from jax.experimental.pallas import tpu as pltpu

_LANE = 128
_ISSUE_UNROLL = 8  # DMA descriptors issued per loop body in the gather path


def _gelu_tanh(x):
    # bert_pytorch GELU: 0.5 * x * (1 + tanh(sqrt(2/pi) * (x + 0.044715 x^3)))
    c = 0.7978845608028654  # sqrt(2 / pi)
    return 0.5 * x * (1.0 + jnp.tanh(c * (x + 0.044715 * (x * x * x))))


def _round_up(n, m):
    return ((n + m - 1) // m) * m


# ---------------------------------------------------------------------------
# Path 1: small vocab — table resident in VMEM, one-hot row select on the MXU.
# ---------------------------------------------------------------------------
def _fte_vmem_table_kernel(ids_ref, tab_ref, w_ref, b_ref, out_ref):
    """One grid step over T tokens.

    ids_ref : VMEM (T, 1) int32          token ids for this tile
    tab_ref : VMEM (V_pad, H_pad) pdtype  full table (grid-invariant)
    w_ref   : VMEM (H_pad, E_pad) pdtype  proj W^T (grid-invariant)
    b_ref   : VMEM (1, E_pad) float32     proj bias (grid-invariant)
    out_ref : VMEM (T, E_pad) out_dtype
    """
    T = ids_ref.shape[0]
    V_pad = tab_ref.shape[0]

    ids = ids_ref[...]                                          # (T, 1) int32
    iota_v = lax.broadcasted_iota(jnp.int32, (T, V_pad), 1)
    onehot = (iota_v == ids).astype(tab_ref.dtype)              # (T, V_pad) 0/1
    # Row gather as an MXU matmul: exactly one nonzero product per output
    # element, f32 accumulation -> exact reproduction of the selected rows.
    rows = jnp.dot(onehot, tab_ref[...],
                   preferred_element_type=jnp.float32)          # (T, H_pad) f32
    g = _gelu_tanh(rows)                                        # f32 (v5e-safe)
    acc = jnp.dot(g.astype(w_ref.dtype), w_ref[...],
                  preferred_element_type=jnp.float32)           # (T, E_pad) f32
    out_ref[...] = (acc + b_ref[...]).astype(out_ref.dtype)


# ---------------------------------------------------------------------------
# Path 2: large vocab — table stays in HBM, per-row DMA gather (double-buffered
# half tiles), one wait per half, batched descriptor issue.
# ---------------------------------------------------------------------------
def _fte_gather_kernel(ids_ref, emb_hbm, w_ref, b_ref, out_ref, gbuf, sems):
    """One grid step: DMA-gather T embedding rows, GELU (f32), project (MXU).

    ids_ref : SMEM (N_pad,) int32          scalar-prefetched token ids
    emb_hbm : HBM  (V, H_pad) pdtype       full table, never copied wholesale
    w_ref   : VMEM (H_pad, E_pad) pdtype   grid-invariant
    b_ref   : VMEM (1, E_pad) float32      grid-invariant
    out_ref : VMEM (T, E_pad) out_dtype
    gbuf    : VMEM (2, half, H_pad) pdtype half-tile gather buffers
    sems    : DMA semaphores (2,)
    """
    i = pl.program_id(0)
    _, half, _ = gbuf.shape
    base = i * (2 * half)

    def start_gather(c):
        off = base + c * half

        def issue_block(chunk, carry):
            # Batch _ISSUE_UNROLL descriptor starts per loop body so the loop
            # control is amortized and the LLO scheduler can pack id-reads
            # with DMA starts.
            t0 = pl.multiple_of(chunk * _ISSUE_UNROLL, _ISSUE_UNROLL)
            for j in range(_ISSUE_UNROLL):
                t = t0 + j
                tok = ids_ref[off + t]
                pltpu.make_async_copy(
                    emb_hbm.at[pl.ds(tok, 1), :],
                    gbuf.at[c, pl.ds(t, 1), :],
                    sems.at[c],
                ).start()
            return carry

        lax.fori_loop(0, half // _ISSUE_UNROLL, issue_block, 0)

    def wait_gather(c):
        # Single wait per half.  The descriptor's byte count is derived from
        # the destination buffer (half * H_pad * itemsize) and therefore
        # always matches the sum of the `half` row copies issued above,
        # regardless of gbuf row shape / dtype.
        pltpu.make_async_copy(gbuf.at[c], gbuf.at[c], sems.at[c]).wait()

    def compute(c):
        e = gbuf[c].astype(jnp.float32)                 # (half, H_pad) f32
        g = _gelu_tanh(e)                               # GELU in f32 (v5e-safe)
        acc = jnp.dot(g.astype(w_ref.dtype), w_ref[...],
                      preferred_element_type=jnp.float32)    # 256-row MXU matmul
        out_ref[pl.ds(c * half, half), :] = (acc + b_ref[...]).astype(out_ref.dtype)

    # Issue both halves' gathers up front; half 1's transfers overlap half 0's
    # GELU + projection.
    start_gather(0)
    start_gather(1)
    wait_gather(0)
    compute(0)
    wait_gather(1)
    compute(1)


# ---------------------------------------------------------------------------
# Wrapper
# ---------------------------------------------------------------------------
def factorized_token_embedding(ids, emb_table, proj_w_t, proj_b, *,
                               token_tile=512,
                               param_dtype=jnp.bfloat16,
                               out_dtype=jnp.float32,
                               table_vmem_budget_bytes=8 * 1024 * 1024,
                               vmem_limit_bytes=32 * 1024 * 1024):
    """ids: [B, S] int (values in [0, V)) -> [B, S, E] in out_dtype.

    Set out_dtype=jnp.bfloat16 when the consumer accepts it: the output
    writeback dominates HBM traffic for factorized embeddings (E >> H).
    """
    B, S = ids.shape
    V, H = emb_table.shape
    H2, E = proj_w_t.shape
    assert H2 == H
    assert token_tile % 256 == 0, "token_tile must be a multiple of 256"
    T = token_tile

    # Lane-dense padding of H and E to multiples of 128.  Zero rows/columns are
    # exact no-ops through GELU (gelu(0) == 0) and the projection.
    H_pad = _round_up(H, _LANE)
    E_pad = _round_up(E, _LANE)
    w_p = jnp.pad(proj_w_t, ((0, H_pad - H), (0, E_pad - E))).astype(param_dtype)
    b_p = jnp.pad(proj_b, (0, E_pad - E)).astype(jnp.float32).reshape(1, E_pad)

    N = B * S
    N_pad = _round_up(N, T)
    ids_flat = ids.reshape(N).astype(jnp.int32)
    if N_pad != N:
        # Padded tail tokens use id 0; their rows are computed then sliced off,
        # so we never rely on the padding_idx row staying zero.
        ids_flat = jnp.pad(ids_flat, (0, N_pad - N))

    pbytes = jnp.dtype(param_dtype).itemsize
    obytes = jnp.dtype(out_dtype).itemsize
    grid = (N_pad // T,)
    cparams = pltpu.CompilerParams(
        dimension_semantics=("parallel",),
        vmem_limit_bytes=vmem_limit_bytes,
    )

    V_pad = _round_up(V, _LANE)
    # Fast path: whole table in VMEM + one-hot MXU row select.  Cap V_pad so
    # the one-hot matmul flops stay small relative to the projection.
    use_vmem_table = (V_pad * H_pad * pbytes <= table_vmem_budget_bytes
                      and V_pad <= 2048)

    if use_vmem_table:
        tab_p = jnp.pad(emb_table,
                        ((0, V_pad - V), (0, H_pad - H))).astype(param_dtype)
        ids_2d = ids_flat.reshape(N_pad, 1)
        cost = pl.CostEstimate(
            flops=2 * N_pad * V_pad * H_pad + 2 * N_pad * H_pad * E_pad,
            transcendentals=N_pad * H_pad,
            bytes_accessed=(N_pad * 4 + V_pad * H_pad * pbytes
                            + H_pad * E_pad * pbytes + E_pad * 4
                            + N_pad * E_pad * obytes),
        )
        out = pl.pallas_call(
            _fte_vmem_table_kernel,
            out_shape=jax.ShapeDtypeStruct((N_pad, E_pad), out_dtype),
            grid_spec=pltpu.PrefetchScalarGridSpec(
                num_scalar_prefetch=0,
                grid=grid,
                in_specs=[
                    pl.BlockSpec((T, 1), lambda i: (i, 0)),           # ids
                    pl.BlockSpec((V_pad, H_pad), lambda i: (0, 0)),   # table
                    pl.BlockSpec((H_pad, E_pad), lambda i: (0, 0)),   # proj W^T
                    pl.BlockSpec((1, E_pad), lambda i: (0, 0)),       # proj bias
                ],
                out_specs=pl.BlockSpec((T, E_pad), lambda i: (i, 0)),
            ),
            compiler_params=cparams,
            cost_estimate=cost,
        )(ids_2d, tab_p, w_p, b_p)
    else:
        emb_p = jnp.pad(emb_table, ((0, 0), (0, H_pad - H))).astype(param_dtype)
        half = T // 2
        cost = pl.CostEstimate(
            flops=2 * N_pad * H_pad * E_pad,
            transcendentals=N_pad * H_pad,
            bytes_accessed=(N_pad * 4                          # token ids (SMEM)
                            + N_pad * H_pad * pbytes           # gathered rows
                            + H_pad * E_pad * pbytes           # proj weight
                            + E_pad * 4                        # bias
                            + N_pad * E_pad * obytes),         # output
        )
        out = pl.pallas_call(
            _fte_gather_kernel,
            out_shape=jax.ShapeDtypeStruct((N_pad, E_pad), out_dtype),
            grid_spec=pltpu.PrefetchScalarGridSpec(
                num_scalar_prefetch=1,
                grid=grid,
                in_specs=[
                    pl.BlockSpec(memory_space=pl.ANY),                     # table, HBM
                    pl.BlockSpec((H_pad, E_pad), lambda i, _ids: (0, 0)),  # proj W^T
                    pl.BlockSpec((1, E_pad), lambda i, _ids: (0, 0)),      # proj bias
                ],
                out_specs=pl.BlockSpec((T, E_pad), lambda i, _ids: (i, 0)),
                scratch_shapes=[
                    pltpu.VMEM((2, half, H_pad), param_dtype),
                    pltpu.SemaphoreType.DMA((2,)),
                ],
            ),
            compiler_params=cparams,
            cost_estimate=cost,
        )(ids_flat, emb_p, w_p, b_p)

    return out[:N, :E].reshape(B, S, E)


def _reference(ids, emb_table_f32, proj_w_t_f32, proj_b):
    e = jnp.take(emb_table_f32, ids, axis=0)            # [B, S, H]
    g = _gelu_tanh(e)
    return jnp.einsum("bsh,he->bse", g, proj_w_t_f32) + proj_b


if __name__ == "__main__":
    # Module hyperparameters (small, consistent with the forward pass).
    num_embeddings = 32   # V
    embedding_dim = 64    # E
    hidden_dim = 32       # H
    padding_idx = 0
    B, S = 2, 8

    key = jax.random.PRNGKey(0)
    k_emb, k_w, k_b, k_ids = jax.random.split(key, 4)

    emb_table = 0.02 * jax.random.normal(k_emb, (num_embeddings, hidden_dim),
                                         dtype=jnp.float32)
    # nn.Embedding(padding_idx=...) zeroes that row at init.
    emb_table = emb_table.at[padding_idx].set(0.0)

    # nn.Linear(hidden_dim, embedding_dim): weight [E, H], bias [E].
    # Stored pre-transposed as [H, E] so the kernel computes g @ W_t + b.
    proj_w_t = 0.02 * jax.random.normal(k_w, (hidden_dim, embedding_dim),
                                        dtype=jnp.float32)
    proj_b = 0.01 * jax.random.normal(k_b, (embedding_dim,), dtype=jnp.float32)

    ids = jax.random.randint(k_ids, (B, S), 0, num_embeddings, dtype=jnp.int32)
    ids = ids.at[0, 0].set(padding_idx)

    # Reference computed in f32 from the same bf16-rounded parameters the
    # kernel consumes (remaining diff = bf16 cast of the MXU inputs only).
    emb_bf = emb_table.astype(jnp.bfloat16).astype(jnp.float32)
    w_bf = proj_w_t.astype(jnp.bfloat16).astype(jnp.float32)
    ref = _reference(ids, emb_bf, w_bf, proj_b)

    # 1) Fast path (VMEM-resident table), f32 output.
    out_f32 = factorized_token_embedding(ids, emb_table, proj_w_t, proj_b)
    out_f32 = jax.block_until_ready(out_f32)
    assert out_f32.shape == (B, S, embedding_dim)
    assert jnp.allclose(out_f32, ref, atol=1e-3, rtol=1e-2), "fast path f32 mismatch"

    # 2) Fast path, bf16 output (halves the dominant HBM writeback stream).
    out_bf16 = factorized_token_embedding(ids, emb_table, proj_w_t, proj_b,
                                          out_dtype=jnp.bfloat16)
    out_bf16 = jax.block_until_ready(out_bf16)
    assert jnp.allclose(out_bf16.astype(jnp.float32), ref,
                        atol=2e-3, rtol=2e-2), "fast path bf16 mismatch"

    # 3) Big-V path (HBM row-gather), forced by a zero VMEM-table budget.
    out_gather = factorized_token_embedding(ids, emb_table, proj_w_t, proj_b,
                                            table_vmem_budget_bytes=0)
    out_gather = jax.block_until_ready(out_gather)
    assert jnp.allclose(out_gather, ref, atol=1e-3, rtol=1e-2), \
        "gather path mismatch"

    print("KERNEL_OK")
</pallas_src>

<mosaic_0001>
module attributes {stable_mosaic.version = 11 : i64} {
  func.func @_fte_vmem_table_kernel(%arg0: i32, %arg1: memref<512x1xi32, #tpu.memory_space<vmem>>, %arg2: memref<128x128xbf16, #tpu.memory_space<vmem>>, %arg3: memref<128x128xbf16, #tpu.memory_space<vmem>>, %arg4: memref<1x128xf32, #tpu.memory_space<vmem>>, %arg5: memref<512x128xf32, #tpu.memory_space<vmem>>) attributes {dimension_semantics = [#tpu.dimension_semantics<parallel>], iteration_bounds = array<i64: 1>, scalar_prefetch = 0 : i64, scratch_operands = 0 : i64, tpu.core_type = #tpu.core_type<tc>, window_params = [{transform_indices = @transform_0, window_bounds = array<i64: 512, 1>}, {pipeline_mode = #tpu.pipeline_mode<synchronous>, transform_indices = @transform_1, window_bounds = array<i64: 128, 128>}, {pipeline_mode = #tpu.pipeline_mode<synchronous>, transform_indices = @transform_2, window_bounds = array<i64: 128, 128>}, {pipeline_mode = #tpu.pipeline_mode<synchronous>, transform_indices = @transform_3, window_bounds = array<i64: 1, 128>}, {transform_indices = @transform_4, window_bounds = array<i64: 512, 128>}]} {
    %c0 = arith.constant 0 : index
    %c0_0 = arith.constant 0 : index
    %0 = vector.load %arg1[%c0, %c0_0] : memref<512x1xi32, #tpu.memory_space<vmem>>, vector<512x1xi32>
    %1 = tpu.iota {dimensions = array<i32: 1>} : vector<512x128xi32>
    %2 = vector.broadcast %0 : vector<512x1xi32> to vector<512x128xi32>
    %3 = arith.cmpi eq, %1, %2 : vector<512x128xi32>
    %4 = arith.extui %3 : vector<512x128xi1> to vector<512x128xi32>
    %5 = arith.sitofp %4 : vector<512x128xi32> to vector<512x128xf32>
    %6 = arith.truncf %5 : vector<512x128xf32> to vector<512x128xbf16>
    %c0_1 = arith.constant 0 : index
    %c0_2 = arith.constant 0 : index
    %7 = vector.load %arg2[%c0_1, %c0_2] : memref<128x128xbf16, #tpu.memory_space<vmem>>, vector<128x128xbf16>
    %cst = arith.constant dense<0.000000e+00> : vector<512x128xf32>
    %8 = tpu.matmul %6, %7, %cst {dimension_numbers = #tpu.dot_dimension_numbers<[1], [0], [0], [1], [0, 0, 1, 1], [], []>} : vector<512x128xbf16>, vector<128x128xbf16>, vector<512x128xf32> -> vector<512x128xf32>
    %cst_3 = arith.constant 5.000000e-01 : f32
    %9 = vector.broadcast %cst_3 : f32 to vector<512x128xf32>
    %10 = arith.mulf %9, %8 : vector<512x128xf32>
    %11 = arith.mulf %8, %8 : vector<512x128xf32>
    %12 = arith.mulf %11, %8 : vector<512x128xf32>
    %cst_4 = arith.constant 4.471500e-02 : f32
    %13 = vector.broadcast %cst_4 : f32 to vector<512x128xf32>
    %14 = arith.mulf %13, %12 : vector<512x128xf32>
    %15 = arith.addf %8, %14 : vector<512x128xf32>
    %cst_5 = arith.constant 0.797884583 : f32
    %16 = vector.broadcast %cst_5 : f32 to vector<512x128xf32>
    %17 = arith.mulf %16, %15 : vector<512x128xf32>
    %18 = math.tanh %17 : vector<512x128xf32>
    %cst_6 = arith.constant 1.000000e+00 : f32
    %19 = vector.broadcast %cst_6 : f32 to vector<512x128xf32>
    %20 = arith.addf %19, %18 : vector<512x128xf32>
    %21 = arith.mulf %10, %20 : vector<512x128xf32>
    %22 = arith.truncf %21 : vector<512x128xf32> to vector<512x128xbf16>
    %c0_7 = arith.constant 0 : index
    %c0_8 = arith.constant 0 : index
    %23 = vector.load %arg3[%c0_7, %c0_8] : memref<128x128xbf16, #tpu.memory_space<vmem>>, vector<128x128xbf16>
    %cst_9 = arith.constant dense<0.000000e+00> : vector<512x128xf32>
    %24 = tpu.matmul %22, %23, %cst_9 {dimension_numbers = #tpu.dot_dimension_numbers<[1], [0], [0], [1], [0, 0, 1, 1], [], []>} : vector<512x128xbf16>, vector<128x128xbf16>, vector<512x128xf32> -> vector<512x128xf32>
    %c0_10 = arith.constant 0 : index
    %c0_11 = arith.constant 0 : index
    %25 = vector.load %arg4[%c0_10, %c0_11] : memref<1x128xf32, #tpu.memory_space<vmem>>, vector<1x128xf32>
    %26 = vector.broadcast %25 : vector<1x128xf32> to vector<512x128xf32>
    %27 = arith.addf %24, %26 : vector<512x128xf32>
    %c0_12 = arith.constant 0 : index
    %c0_13 = arith.constant 0 : index
    %28 = vector.load %arg5[%c0_12, %c0_13] : memref<512x128xf32, #tpu.memory_space<vmem>>, vector<512x128xf32>
    tpu.vector_store %arg5[%c0_12, %c0_13], %27 {strides = array<i32>} : memref<512x128xf32, #tpu.memory_space<vmem>>, vector<512x128xf32>,
    return
  }
  func.func @transform_0(%arg0: i32) -> (i32, i32) {
    %c0_i32 = arith.constant 0 : i32
    %c0_i32_0 = arith.constant 0 : i32
    return %arg0, %c0_i32 : i32, i32
  }
  func.func @transform_1(%arg0: i32) -> (i32, i32) {
    %c0_i32 = arith.constant 0 : i32
    %c0_i32_0 = arith.constant 0 : i32
    %c0_i32_1 = arith.constant 0 : i32
    return %c0_i32, %c0_i32_0 : i32, i32
  }
  func.func @transform_2(%arg0: i32) -> (i32, i32) {
    %c0_i32 = arith.constant 0 : i32
    %c0_i32_0 = arith.constant 0 : i32
    %c0_i32_1 = arith.constant 0 : i32
    return %c0_i32, %c0_i32_0 : i32, i32
  }
  func.func @transform_3(%arg0: i32) -> (i32, i32) {
    %c0_i32 = arith.constant 0 : i32
    %c0_i32_0 = arith.constant 0 : i32
    %c0_i32_1 = arith.constant 0 : i32
    return %c0_i32, %c0_i32_0 : i32, i32
  }
  func.func @transform_4(%arg0: i32) -> (i32, i32) {
    %c0_i32 = arith.constant 0 : i32
    %c0_i32_0 = arith.constant 0 : i32
    return %arg0, %c0_i32 : i32, i32
  }
}

</mosaic_0001>

<llo_original>
// kernel: tpu_custom_call.1
$region0: #{tpu_custom_call.1}
  #allocation0 [shape = 'u32[]', space=smem, size = 0x4, offset = 0x4, fixed_abs, tag = 'smem constant byte address 0x4 - core index']
  #allocation1 [shape = 'u32[72,128]{1,0:T(1,128)}', space=vmem, size = 0x9000, scoped, tag = 'internal scratch']
  %s0 = inlined_call_operand.vmem [shape: s32[512,1], index: 0, kind: input, shape index: {}]
  %s1 = inlined_call_operand.vmem [shape: bf16[128,128], index: 1, kind: input, shape index: {}]
  %s2 = inlined_call_operand.vmem [shape: bf16[128,128], index: 2, kind: input, shape index: {}]
  %s3 = inlined_call_operand.vmem [shape: f32[1,128], index: 3, kind: input, shape index: {}]
  %s4 = inlined_call_operand.hbm [shape: f32[512,128], index: 4, kind: output, shape index: {}]
  %s5 = sld [smem:[#allocation0]]
  $region26: #{tpu_custom_call.1} parent=0
    _
  %s7 = ssub.s32 1, %s5
  %s8 = scalar_select 0, %s7, %s5
  $region1: #{tpu_custom_call.1} parent=0
    #allocation2 [shape = 'u8[262144]{0}', space=vmem, size = 0x40000, scoped, tag = 'output window, operand 0, single buffered']
    #allocation3 [shape = 's32[1]{0}', space=sflag, size = 0x4, scoped, tag = 'scoped memory for tpu_custom_call.1']
    %9 = vsyncpa [#allocation3], 0
    // Predicated region
    $region2: #{tpu_custom_call.1} parent=1 // pred_check
      _
    $region3: #{tpu_custom_call.1} parent=1 // pred_check_branch
      %11 = sbr.rel (0) target = $region5
    $region4: #{tpu_custom_call.1} parent=1 // pred_region
      _
    $region5: #{tpu_custom_call.1} parent=1 // pred_fallthru
      _
    // Predicated region
    $region6: #{tpu_custom_call.1} parent=1 // pred_check
      _
    $region7: #{tpu_custom_call.1} parent=1 // pred_check_branch
      %13 = sbr.rel (0) target = $region9
    $region8: #{tpu_custom_call.1} parent=1 // pred_region
      _
    $region9: #{tpu_custom_call.1} parent=1 // pred_fallthru
      _
    // Predicated region
    $region10: #{tpu_custom_call.1} parent=1 // pred_check
      _
    $region11: #{tpu_custom_call.1} parent=1 // pred_check_branch
      %15 = sbr.rel (0) target = $region13
    $region12: #{tpu_custom_call.1} parent=1 // pred_region
      _
    $region13: #{tpu_custom_call.1} parent=1 // pred_fallthru
      _
    // Predicated region
    $region14: #{tpu_custom_call.1} parent=1 // pred_check
      _
    $region15: #{tpu_custom_call.1} parent=1 // pred_check_branch
      %17 = sbr.rel (0) target = $region17
    $region16: #{tpu_custom_call.1} parent=1 // pred_region
      _
    $region17: #{tpu_custom_call.1} parent=1 // pred_fallthru
      _
    %v18 = vld [vmem:[%s0] sm:$0xff]
    %v19 = vld [vmem:[%s0 + $0x8] sm:$0xff]
    %v20 = vld [vmem:[%s0 + $0x10] sm:$0xff]
    %v21 = vld [vmem:[%s0 + $0x18] sm:$0xff]
    %v22 = vld [vmem:[%s0 + $0x20] sm:$0xff]
    %v23 = vld [vmem:[%s0 + $0x28] sm:$0xff]
    %v24 = vld [vmem:[%s0 + $0x30] sm:$0xff]
    %v25 = vld [vmem:[%s0 + $0x38] sm:$0xff]
    %v26 = vld [vmem:[%s0 + $0x40] sm:$0xff]
    %v27 = vld [vmem:[%s0 + $0x48] sm:$0xff]
    %v28 = vld [vmem:[%s0 + $0x50] sm:$0xff]
    %v29 = vld [vmem:[%s0 + $0x58] sm:$0xff]
    %v30 = vld [vmem:[%s0 + $0x60] sm:$0xff]
    %v31 = vld [vmem:[%s0 + $0x68] sm:$0xff]
    %v32 = vld [vmem:[%s0 + $0x70] sm:$0xff]
    %v33 = vld [vmem:[%s0 + $0x78] sm:$0xff]
    %v34 = vld [vmem:[%s0 + $0x80] sm:$0xff]
    %v35 = vld [vmem:[%s0 + $0x88] sm:$0xff]
    %v36 = vld [vmem:[%s0 + $0x90] sm:$0xff]
    %v37 = vld [vmem:[%s0 + $0x98] sm:$0xff]
    %v38 = vld [vmem:[%s0 + $0xa0] sm:$0xff]
    %v39 = vld [vmem:[%s0 + $0xa8] sm:$0xff]
    %v40 = vld [vmem:[%s0 + $0xb0] sm:$0xff]
    %v41 = vld [vmem:[%s0 + $0xb8] sm:$0xff]
    %v42 = vld [vmem:[%s0 + $0xc0] sm:$0xff]
    %v43 = vld [vmem:[%s0 + $0xc8] sm:$0xff]
    %v44 = vld [vmem:[%s0 + $0xd0] sm:$0xff]
    %v45 = vld [vmem:[%s0 + $0xd8] sm:$0xff]
    %v46 = vld [vmem:[%s0 + $0xe0] sm:$0xff]
    %v47 = vld [vmem:[%s0 + $0xe8] sm:$0xff]
    %v48 = vld [vmem:[%s0 + $0xf0] sm:$0xff]
    %v49 = vld [vmem:[%s0 + $0xf8] sm:$0xff]
    %v50 = vld [vmem:[%s0 + $0x100] sm:$0xff]
    %v51 = vld [vmem:[%s0 + $0x108] sm:$0xff]
    %v52 = vld [vmem:[%s0 + $0x110] sm:$0xff]
    %v53 = vld [vmem:[%s0 + $0x118] sm:$0xff]
    %v54 = vld [vmem:[%s0 + $0x120] sm:$0xff]
    %v55 = vld [vmem:[%s0 + $0x128] sm:$0xff]
    %v56 = vld [vmem:[%s0 + $0x130] sm:$0xff]
    %v57 = vld [vmem:[%s0 + $0x138] sm:$0xff]
    %v58 = vld [vmem:[%s0 + $0x140] sm:$0xff]
    %v59 = vld [vmem:[%s0 + $0x148] sm:$0xff]
    %v60 = vld [vmem:[%s0 + $0x150] sm:$0xff]
    %v61 = vld [vmem:[%s0 + $0x158] sm:$0xff]
    %v62 = vld [vmem:[%s0 + $0x160] sm:$0xff]
    %v63 = vld [vmem:[%s0 + $0x168] sm:$0xff]
    %v64 = vld [vmem:[%s0 + $0x170] sm:$0xff]
    %v65 = vld [vmem:[%s0 + $0x178] sm:$0xff]
    %v66 = vld [vmem:[%s0 + $0x180] sm:$0xff]
    %v67 = vld [vmem:[%s0 + $0x188] sm:$0xff]
    %v68 = vld [vmem:[%s0 + $0x190] sm:$0xff]
    %v69 = vld [vmem:[%s0 + $0x198] sm:$0xff]
    %v70 = vld [vmem:[%s0 + $0x1a0] sm:$0xff]
    %v71 = vld [vmem:[%s0 + $0x1a8] sm:$0xff]
    %v72 = vld [vmem:[%s0 + $0x1b0] sm:$0xff]
    %v73 = vld [vmem:[%s0 + $0x1b8] sm:$0xff]
    %v74 = vld [vmem:[%s0 + $0x1c0] sm:$0xff]
    %v75 = vld [vmem:[%s0 + $0x1c8] sm:$0xff]
    %v76 = vld [vmem:[%s0 + $0x1d0] sm:$0xff]
    %v77 = vld [vmem:[%s0 + $0x1d8] sm:$0xff]
    %v78 = vld [vmem:[%s0 + $0x1e0] sm:$0xff]
    %v79 = vld [vmem:[%s0 + $0x1e8] sm:$0xff]
    %v80 = vld [vmem:[%s0 + $0x1f0] sm:$0xff]
    %v81 = vld [vmem:[%s0 + $0x1f8] sm:$0xff]
    %v82 = vlaneseq
    %v83 = vand.u32 %v82, 127
    %84 = vset.pattern.permute.xlu0 0
    %85 = vperm.xlu0 %84, %v18
    %v86 = vpop.permute.xlu0 %85
    %87 = vset.pattern.permute.xlu0 0
    %88 = vperm.xlu0 %87, %v19
    %v89 = vpop.permute.xlu0 %88
    %90 = vset.pattern.permute.xlu0 0
    %91 = vperm.xlu0 %90, %v20
    %v92 = vpop.permute.xlu0 %91
    %93 = vset.pattern.permute.xlu0 0
    %94 = vperm.xlu0 %93, %v21
    %v95 = vpop.permute.xlu0 %94
    %96 = vset.pattern.permute.xlu0 0
    %97 = vperm.xlu0 %96, %v22
    %v98 = vpop.permute.xlu0 %97
    %99 = vset.pattern.permute.xlu0 0
    %100 = vperm.xlu0 %99, %v23
    %v101 = vpop.permute.xlu0 %100
    %102 = vset.pattern.permute.xlu0 0
    %103 = vperm.xlu0 %102, %v24
    %v104 = vpop.permute.xlu0 %103
    %105 = vset.pattern.permute.xlu0 0
    %106 = vperm.xlu0 %105, %v25
    %v107 = vpop.permute.xlu0 %106
    %108 = vset.pattern.permute.xlu0 0
    %109 = vperm.xlu0 %108, %v26
    %v110 = vpop.permute.xlu0 %109
    %111 = vset.pattern.permute.xlu0 0
    %112 = vperm.xlu0 %111, %v27
    %v113 = vpop.permute.xlu0 %112
    %114 = vset.pattern.permute.xlu0 0
    %115 = vperm.xlu0 %114, %v28
    %v116 = vpop.permute.xlu0 %115
    %117 = vset.pattern.permute.xlu0 0
    %118 = vperm.xlu0 %117, %v29
    %v119 = vpop.permute.xlu0 %118
    %120 = vset.pattern.permute.xlu0 0
    %121 = vperm.xlu0 %120, %v30
    %v122 = vpop.permute.xlu0 %121
    %123 = vset.pattern.permute.xlu0 0
    %124 = vperm.xlu0 %123, %v31
    %v125 = vpop.permute.xlu0 %124
    %126 = vset.pattern.permute.xlu0 0
    %127 = vperm.xlu0 %126, %v32
    %v128 = vpop.permute.xlu0 %127
    %129 = vset.pattern.permute.xlu0 0
    %130 = vperm.xlu0 %129, %v33
    %v131 = vpop.permute.xlu0 %130
    %132 = vset.pattern.permute.xlu0 0
    %133 = vperm.xlu0 %132, %v34
    %v134 = vpop.permute.xlu0 %133
    %135 = vset.pattern.permute.xlu0 0
    %136 = vperm.xlu0 %135, %v35
    %v137 = vpop.permute.xlu0 %136
    %138 = vset.pattern.permute.xlu0 0
    %139 = vperm.xlu0 %138, %v36
    %v140 = vpop.permute.xlu0 %139
    %141 = vset.pattern.permute.xlu0 0
    %142 = vperm.xlu0 %141, %v37
    %v143 = vpop.permute.xlu0 %142
    %144 = vset.pattern.permute.xlu0 0
    %145 = vperm.xlu0 %144, %v38
    %v146 = vpop.permute.xlu0 %145
    %147 = vset.pattern.permute.xlu0 0
    %148 = vperm.xlu0 %147, %v39
    %v149 = vpop.permute.xlu0 %148
    %150 = vset.pattern.permute.xlu0 0
    %151 = vperm.xlu0 %150, %v40
    %v152 = vpop.permute.xlu0 %151
    %153 = vset.pattern.permute.xlu0 0
    %154 = vperm.xlu0 %153, %v41
    %v155 = vpop.permute.xlu0 %154
    %156 = vset.pattern.permute.xlu0 0
    %157 = vperm.xlu0 %156, %v42
    %v158 = vpop.permute.xlu0 %157
    %159 = vset.pattern.permute.xlu0 0
    %160 = vperm.xlu0 %159, %v43
    %v161 = vpop.permute.xlu0 %160
    %162 = vset.pattern.permute.xlu0 0
    %163 = vperm.xlu0 %162, %v44
    %v164 = vpop.permute.xlu0 %163
    %165 = vset.pattern.permute.xlu0 0
    %166 = vperm.xlu0 %165, %v45
    %v167 = vpop.permute.xlu0 %166
    %168 = vset.pattern.permute.xlu0 0
    %169 = vperm.xlu0 %168, %v46
    %v170 = vpop.permute.xlu0 %169
    %171 = vset.pattern.permute.xlu0 0
    %172 = vperm.xlu0 %171, %v47
    %v173 = vpop.permute.xlu0 %172
    %174 = vset.pattern.permute.xlu0 0
    %175 = vperm.xlu0 %174, %v48
    %v176 = vpop.permute.xlu0 %175
    %177 = vset.pattern.permute.xlu0 0
    %178 = vperm.xlu0 %177, %v49
    %v179 = vpop.permute.xlu0 %178
    %180 = vset.pattern.permute.xlu0 0
    %181 = vperm.xlu0 %180, %v50
    %v182 = vpop.permute.xlu0 %181
    %183 = vset.pattern.permute.xlu0 0
    %184 = vperm.xlu0 %183, %v51
    %v185 = vpop.permute.xlu0 %184
    %186 = vset.pattern.permute.xlu0 0
    %187 = vperm.xlu0 %186, %v52
    %v188 = vpop.permute.xlu0 %187
    %189 = vset.pattern.permute.xlu0 0
    %190 = vperm.xlu0 %189, %v53
    %v191 = vpop.permute.xlu0 %190
    %192 = vset.pattern.permute.xlu0 0
    %193 = vperm.xlu0 %192, %v54
    %v194 = vpop.permute.xlu0 %193
    %195 = vset.pattern.permute.xlu0 0
    %196 = vperm.xlu0 %195, %v55
    %v197 = vpop.permute.xlu0 %196
    %198 = vset.pattern.permute.xlu0 0
    %199 = vperm.xlu0 %198, %v56
    %v200 = vpop.permute.xlu0 %199
    %201 = vset.pattern.permute.xlu0 0
    %202 = vperm.xlu0 %201, %v57
    %v203 = vpop.permute.xlu0 %202
    %204 = vset.pattern.permute.xlu0 0
    %205 = vperm.xlu0 %204, %v58
    %v206 = vpop.permute.xlu0 %205
    %207 = vset.pattern.permute.xlu0 0
    %208 = vperm.xlu0 %207, %v59
    %v209 = vpop.permute.xlu0 %208
    %210 = vset.pattern.permute.xlu0 0
    %211 = vperm.xlu0 %210, %v60
    %v212 = vpop.permute.xlu0 %211
    %213 = vset.pattern.permute.xlu0 0
    %214 = vperm.xlu0 %213, %v61
    %v215 = vpop.permute.xlu0 %214
    %216 = vset.pattern.permute.xlu0 0
    %217 = vperm.xlu0 %216, %v62
    %v218 = vpop.permute.xlu0 %217
    %219 = vset.pattern.permute.xlu0 0
    %220 = vperm.xlu0 %219, %v63
    %v221 = vpop.permute.xlu0 %220
    %222 = vset.pattern.permute.xlu0 0
    %223 = vperm.xlu0 %222, %v64
    %v224 = vpop.permute.xlu0 %223
    %225 = vset.pattern.permute.xlu0 0
    %226 = vperm.xlu0 %225, %v65
    %v227 = vpop.permute.xlu0 %226
    %228 = vset.pattern.permute.xlu0 0
    %229 = vperm.xlu0 %228, %v66
    %v230 = vpop.permute.xlu0 %229
    %231 = vset.pattern.permute.xlu0 0
    %232 = vperm.xlu0 %231, %v67
    %v233 = vpop.permute.xlu0 %232
    %234 = vset.pattern.permute.xlu0 0
    %235 = vperm.xlu0 %234, %v68
    %v236 = vpop.permute.xlu0 %235
    %237 = vset.pattern.permute.xlu0 0
    %238 = vperm.xlu0 %237, %v69
    %v239 = vpop.permute.xlu0 %238
    %240 = vset.pattern.permute.xlu0 0
    %241 = vperm.xlu0 %240, %v70
    %v242 = vpop.permute.xlu0 %241
    %243 = vset.pattern.permute.xlu0 0
    %244 = vperm.xlu0 %243, %v71
    %v245 = vpop.permute.xlu0 %244
    %246 = vset.pattern.permute.xlu0 0
    %247 = vperm.xlu0 %246, %v72
    %v248 = vpop.permute.xlu0 %247
    %249 = vset.pattern.permute.xlu0 0
    %250 = vperm.xlu0 %249, %v73
    %v251 = vpop.permute.xlu0 %250
    %252 = vset.pattern.permute.xlu0 0
    %253 = vperm.xlu0 %252, %v74
    %v254 = vpop.permute.xlu0 %253
    %255 = vset.pattern.permute.xlu0 0
    %256 = vperm.xlu0 %255, %v75
    %v257 = vpop.permute.xlu0 %256
    %258 = vset.pattern.permute.xlu0 0
    %259 = vperm.xlu0 %258, %v76
    %v260 = vpop.permute.xlu0 %259
    %261 = vset.pattern.permute.xlu0 0
    %262 = vperm.xlu0 %261, %v77
    %v263 = vpop.permute.xlu0 %262
    %264 = vset.pattern.permute.xlu0 0
    %265 = vperm.xlu0 %264, %v78
    %v266 = vpop.permute.xlu0 %265
    %267 = vset.pattern.permute.xlu0 0
    %268 = vperm.xlu0 %267, %v79
    %v269 = vpop.permute.xlu0 %268
    %270 = vset.pattern.permute.xlu0 0
    %271 = vperm.xlu0 %270, %v80
    %v272 = vpop.permute.xlu0 %271
    %273 = vset.pattern.permute.xlu0 0
    %274 = vperm.xlu0 %273, %v81
    %v275 = vpop.permute.xlu0 %274
    %vm276 = vcmp.eq.s32.totalorder %v83, %v86
    %vm277 = vcmp.eq.s32.totalorder %v83, %v89
    %vm278 = vcmp.eq.s32.totalorder %v83, %v92
    %vm279 = vcmp.eq.s32.totalorder %v83, %v95
    %vm280 = vcmp.eq.s32.totalorder %v83, %v98
    %vm281 = vcmp.eq.s32.totalorder %v83, %v101
    %vm282 = vcmp.eq.s32.totalorder %v83, %v104
    %vm283 = vcmp.eq.s32.totalorder %v83, %v107
    %vm284 = vcmp.eq.s32.totalorder %v83, %v110
    %vm285 = vcmp.eq.s32.totalorder %v83, %v113
    %vm286 = vcmp.eq.s32.totalorder %v83, %v116
    %vm287 = vcmp.eq.s32.totalorder %v83, %v119
    %vm288 = vcmp.eq.s32.totalorder %v83, %v122
    %vm289 = vcmp.eq.s32.totalorder %v83, %v125
    %vm290 = vcmp.eq.s32.totalorder %v83, %v128
    %vm291 = vcmp.eq.s32.totalorder %v83, %v131
    %vm292 = vcmp.eq.s32.totalorder %v83, %v134
    %vm293 = vcmp.eq.s32.totalorder %v83, %v137
    %vm294 = vcmp.eq.s32.totalorder %v83, %v140
    %vm295 = vcmp.eq.s32.totalorder %v83, %v143
    %vm296 = vcmp.eq.s32.totalorder %v83, %v146
    %vm297 = vcmp.eq.s32.totalorder %v83, %v149
    %vm298 = vcmp.eq.s32.totalorder %v83, %v152
    %vm299 = vcmp.eq.s32.totalorder %v83, %v155
    %vm300 = vcmp.eq.s32.totalorder %v83, %v158
    %vm301 = vcmp.eq.s32.totalorder %v83, %v161
    %vm302 = vcmp.eq.s32.totalorder %v83, %v164
    %vm303 = vcmp.eq.s32.totalorder %v83, %v167
    %vm304 = vcmp.eq.s32.totalorder %v83, %v170
    %vm305 = vcmp.eq.s32.totalorder %v83, %v173
    %vm306 = vcmp.eq.s32.totalorder %v83, %v176
    %vm307 = vcmp.eq.s32.totalorder %v83, %v179
    %vm308 = vcmp.eq.s32.totalorder %v83, %v182
    %vm309 = vcmp.eq.s32.totalorder %v83, %v185
    %vm310 = vcmp.eq.s32.totalorder %v83, %v188
    %vm311 = vcmp.eq.s32.totalorder %v83, %v191
    %vm312 = vcmp.eq.s32.totalorder %v83, %v194
    %vm313 = vcmp.eq.s32.totalorder %v83, %v197
    %vm314 = vcmp.eq.s32.totalorder %v83, %v200
    %vm315 = vcmp.eq.s32.totalorder %v83, %v203
    %vm316 = vcmp.eq.s32.totalorder %v83, %v206
    %vm317 = vcmp.eq.s32.totalorder %v83, %v209
    %vm318 = vcmp.eq.s32.totalorder %v83, %v212
    %vm319 = vcmp.eq.s32.totalorder %v83, %v215
    %vm320 = vcmp.eq.s32.totalorder %v83, %v218
    %vm321 = vcmp.eq.s32.totalorder %v83, %v221
    %vm322 = vcmp.eq.s32.totalorder %v83, %v224
    %vm323 = vcmp.eq.s32.totalorder %v83, %v227
    %vm324 = vcmp.eq.s32.totalorder %v83, %v230
    %vm325 = vcmp.eq.s32.totalorder %v83, %v233
    %vm326 = vcmp.eq.s32.totalorder %v83, %v236
    %vm327 = vcmp.eq.s32.totalorder %v83, %v239
    %vm328 = vcmp.eq.s32.totalorder %v83, %v242
    %vm329 = vcmp.eq.s32.totalorder %v83, %v245
    %vm330 = vcmp.eq.s32.totalorder %v83, %v248
    %vm331 = vcmp.eq.s32.totalorder %v83, %v251
    %vm332 = vcmp.eq.s32.totalorder %v83, %v254
    %vm333 = vcmp.eq.s32.totalorder %v83, %v257
    %vm334 = vcmp.eq.s32.totalorder %v83, %v260
    %vm335 = vcmp.eq.s32.totalorder %v83, %v263
    %vm336 = vcmp.eq.s32.totalorder %v83, %v266
    %vm337 = vcmp.eq.s32.totalorder %v83, %v269
    %vm338 = vcmp.eq.s32.totalorder %v83, %v272
    %vm339 = vcmp.eq.s32.totalorder %v83, %v275
    %v340 = vsel %vm276, 1, 0
    %v341 = vsel %vm277, 1, 0
    %v342 = vsel %vm278, 1, 0
    %v343 = vsel %vm279, 1, 0
    %v344 = vsel %vm280, 1, 0
    %v345 = vsel %vm281, 1, 0
    %v346 = vsel %vm282, 1, 0
    %v347 = vsel %vm283, 1, 0
    %v348 = vsel %vm284, 1, 0
    %v349 = vsel %vm285, 1, 0
    %v350 = vsel %vm286, 1, 0
    %v351 = vsel %vm287, 1, 0
    %v352 = vsel %vm288, 1, 0
    %v353 = vsel %vm289, 1, 0
    %v354 = vsel %vm290, 1, 0
    %v355 = vsel %vm291, 1, 0
    %v356 = vsel %vm292, 1, 0
    %v357 = vsel %vm293, 1, 0
    %v358 = vsel %vm294, 1, 0
    %v359 = vsel %vm295, 1, 0
    %v360 = vsel %vm296, 1, 0
    %v361 = vsel %vm297, 1, 0
    %v362 = vsel %vm298, 1, 0
    %v363 = vsel %vm299, 1, 0
    %v364 = vsel %vm300, 1, 0
    %v365 = vsel %vm301, 1, 0
    %v366 = vsel %vm302, 1, 0
    %v367 = vsel %vm303, 1, 0
    %v368 = vsel %vm304, 1, 0
    %v369 = vsel %vm305, 1, 0
    %v370 = vsel %vm306, 1, 0
    %v371 = vsel %vm307, 1, 0
    %v372 = vsel %vm308, 1, 0
    %v373 = vsel %vm309, 1, 0
    %v374 = vsel %vm310, 1, 0
    %v375 = vsel %vm311, 1, 0
    %v376 = vsel %vm312, 1, 0
    %v377 = vsel %vm313, 1, 0
    %v378 = vsel %vm314, 1, 0
    %v379 = vsel %vm315, 1, 0
    %v380 = vsel %vm316, 1, 0
    %v381 = vsel %vm317, 1, 0
    %v382 = vsel %vm318, 1, 0
    %v383 = vsel %vm319, 1, 0
    %v384 = vsel %vm320, 1, 0
    %v385 = vsel %vm321, 1, 0
    %v386 = vsel %vm322, 1, 0
    %v387 = vsel %vm323, 1, 0
    %v388 = vsel %vm324, 1, 0
    %v389 = vsel %vm325, 1, 0
    %v390 = vsel %vm326, 1, 0
    %v391 = vsel %vm327, 1, 0
    %v392 = vsel %vm328, 1, 0
    %v393 = vsel %vm329, 1, 0
    %v394 = vsel %vm330, 1, 0
    %v395 = vsel %vm331, 1, 0
    %v396 = vsel %vm332, 1, 0
    %v397 = vsel %vm333, 1, 0
    %v398 = vsel %vm334, 1, 0
    %v399 = vsel %vm335, 1, 0
    %v400 = vsel %vm336, 1, 0
    %v401 = vsel %vm337, 1, 0
    %v402 = vsel %vm338, 1, 0
    %v403 = vsel %vm339, 1, 0
    %v404 = vcvt.s32.f32 %v340
    %v405 = vcvt.s32.f32 %v341
    %v406 = vcvt.s32.f32 %v342
    %v407 = vcvt.s32.f32 %v343
    %v408 = vcvt.s32.f32 %v344
    %v409 = vcvt.s32.f32 %v345
    %v410 = vcvt.s32.f32 %v346
    %v411 = vcvt.s32.f32 %v347
    %v412 = vcvt.s32.f32 %v348
    %v413 = vcvt.s32.f32 %v349
    %v414 = vcvt.s32.f32 %v350
    %v415 = vcvt.s32.f32 %v351
    %v416 = vcvt.s32.f32 %v352
    %v417 = vcvt.s32.f32 %v353
    %v418 = vcvt.s32.f32 %v354
    %v419 = vcvt.s32.f32 %v355
    %v420 = vcvt.s32.f32 %v356
    %v421 = vcvt.s32.f32 %v357
    %v422 = vcvt.s32.f32 %v358
    %v423 = vcvt.s32.f32 %v359
    %v424 = vcvt.s32.f32 %v360
    %v425 = vcvt.s32.f32 %v361
    %v426 = vcvt.s32.f32 %v362
    %v427 = vcvt.s32.f32 %v363
    %v428 = vcvt.s32.f32 %v364
    %v429 = vcvt.s32.f32 %v365
    %v430 = vcvt.s32.f32 %v366
    %v431 = vcvt.s32.f32 %v367
    %v432 = vcvt.s32.f32 %v368
    %v433 = vcvt.s32.f32 %v369
    %v434 = vcvt.s32.f32 %v370
    %v435 = vcvt.s32.f32 %v371
    %v436 = vcvt.s32.f32 %v372
    %v437 = vcvt.s32.f32 %v373
    %v438 = vcvt.s32.f32 %v374
    %v439 = vcvt.s32.f32 %v375
    %v440 = vcvt.s32.f32 %v376
    %v441 = vcvt.s32.f32 %v377
    %v442 = vcvt.s32.f32 %v378
    %v443 = vcvt.s32.f32 %v379
    %v444 = vcvt.s32.f32 %v380
    %v445 = vcvt.s32.f32 %v381
    %v446 = vcvt.s32.f32 %v382
    %v447 = vcvt.s32.f32 %v383
    %v448 = vcvt.s32.f32 %v384
    %v449 = vcvt.s32.f32 %v385
    %v450 = vcvt.s32.f32 %v386
    %v451 = vcvt.s32.f32 %v387
    %v452 = vcvt.s32.f32 %v388
    %v453 = vcvt.s32.f32 %v389
    %v454 = vcvt.s32.f32 %v390
    %v455 = vcvt.s32.f32 %v391
    %v456 = vcvt.s32.f32 %v392
    %v457 = vcvt.s32.f32 %v393
    %v458 = vcvt.s32.f32 %v394
    %v459 = vcvt.s32.f32 %v395
    %v460 = vcvt.s32.f32 %v396
    %v461 = vcvt.s32.f32 %v397
    %v462 = vcvt.s32.f32 %v398
    %v463 = vcvt.s32.f32 %v399
    %v464 = vcvt.s32.f32 %v400
    %v465 = vcvt.s32.f32 %v401
    %v466 = vcvt.s32.f32 %v402
    %v467 = vcvt.s32.f32 %v403
    %v468 = vpack.c.bf16 %v405, %v404
    %v469 = vpack.c.bf16 %v407, %v406
    %v470 = vpack.c.bf16 %v409, %v408
    %v471 = vpack.c.bf16 %v411, %v410
    %v472 = vpack.c.bf16 %v413, %v412
    %v473 = vpack.c.bf16 %v415, %v414
    %v474 = vpack.c.bf16 %v417, %v416
    %v475 = vpack.c.bf16 %v419, %v418
    %v476 = vpack.c.bf16 %v421, %v420
    %v477 = vpack.c.bf16 %v423, %v422
    %v478 = vpack.c.bf16 %v425, %v424
    %v479 = vpack.c.bf16 %v427, %v426
    %v480 = vpack.c.bf16 %v429, %v428
    %v481 = vpack.c.bf16 %v431, %v430
    %v482 = vpack.c.bf16 %v433, %v432
    %v483 = vpack.c.bf16 %v435, %v434
    %v484 = vpack.c.bf16 %v437, %v436
    %v485 = vpack.c.bf16 %v439, %v438
    %v486 = vpack.c.bf16 %v441, %v440
    %v487 = vpack.c.bf16 %v443, %v442
    %v488 = vpack.c.bf16 %v445, %v444
    %v489 = vpack.c.bf16 %v447, %v446
    %v490 = vpack.c.bf16 %v449, %v448
    %v491 = vpack.c.bf16 %v451, %v450
    %v492 = vpack.c.bf16 %v453, %v452
    %v493 = vpack.c.bf16 %v455, %v454
    %v494 = vpack.c.bf16 %v457, %v456
    %v495 = vpack.c.bf16 %v459, %v458
    %v496 = vpack.c.bf16 %v461, %v460
    %v497 = vpack.c.bf16 %v463, %v462
    %v498 = vpack.c.bf16 %v465, %v464
    %v499 = vpack.c.bf16 %v467, %v466
    %v500 = vld [vmem:[%s1] sm:$0xf]
    %v501 = vld [vmem:[%s1 + $0x4] sm:$0xf]
    %v502 = vld [vmem:[%s1 + $0x8] sm:$0xf]
    %v503 = vld [vmem:[%s1 + $0xc] sm:$0xf]
    %v504 = vld [vmem:[%s1 + $0x10] sm:$0xf]
    %v505 = vld [vmem:[%s1 + $0x14] sm:$0xf]
    %v506 = vld [vmem:[%s1 + $0x18] sm:$0xf]
    %v507 = vld [vmem:[%s1 + $0x1c] sm:$0xf]
    %v508 = vld [vmem:[%s1 + $0x20] sm:$0xf]
    %v509 = vld [vmem:[%s1 + $0x24] sm:$0xf]
    %v510 = vld [vmem:[%s1 + $0x28] sm:$0xf]
    %v511 = vld [vmem:[%s1 + $0x2c] sm:$0xf]
    %v512 = vld [vmem:[%s1 + $0x30] sm:$0xf]
    %v513 = vld [vmem:[%s1 + $0x34] sm:$0xf]
    %v514 = vld [vmem:[%s1 + $0x38] sm:$0xf]
    %v515 = vld [vmem:[%s1 + $0x3c] sm:$0xf]
    %v532 = vunpack.c.l.b16 %v500
    %v533 = vunpack.c.l.b16 %v501
    %v534 = vunpack.c.l.b16 %v502
    %v535 = vunpack.c.l.b16 %v503
    %v536 = vunpack.c.l.b16 %v504
    %v537 = vunpack.c.l.b16 %v505
    %v538 = vunpack.c.l.b16 %v506
    %v539 = vunpack.c.l.b16 %v507
    %v540 = vunpack.c.l.b16 %v508
    %v541 = vunpack.c.l.b16 %v509
    %v542 = vunpack.c.l.b16 %v510
    %v543 = vunpack.c.l.b16 %v511
    %v544 = vunpack.c.l.b16 %v512
    %v545 = vunpack.c.l.b16 %v513
    %v546 = vunpack.c.l.b16 %v514
    %v547 = vunpack.c.l.b16 %v515
    %v548 = vpack.c.b16 %v533, %v532
    %v549 = vpack.c.b16 %v535, %v534
    %v550 = vpack.c.b16 %v537, %v536
    %v551 = vpack.c.b16 %v539, %v538
    %v552 = vpack.c.b16 %v541, %v540
    %v553 = vpack.c.b16 %v543, %v542
    %v554 = vpack.c.b16 %v545, %v544
    %v555 = vpack.c.b16 %v547, %v546
    %564 = vmatpush.bf16.msra.mxu0 %v555
    %565 = vmatpush.bf16.msra.mxu0 %v554
    %566 = vmatpush.bf16.msra.mxu0 %v553
    %567 = vmatpush.bf16.msra.mxu0 %v552
    %568 = vmatpush.bf16.msra.mxu0 %v551
    %569 = vmatpush.bf16.msra.mxu0 %v550
    %570 = vmatpush.bf16.msra.mxu0 %v549
    %571 = vmatpush.bf16.msra.mxu0 %v548
    %572 = vmatmul.bf16.gmra.mxu0 %v468
    %v573 = vpop.f32.mrf.mxu0
    %v574 = vadd.f32 0.0, %v573
    %v575 = vpop.f32.mrf.mxu0
    %v576 = vadd.f32 0.0, %v575
    %577 = vmatmul.bf16.gmra.mxu0 %v469
    %v578 = vpop.f32.mrf.mxu0
    %v579 = vadd.f32 0.0, %v578
    %v580 = vpop.f32.mrf.mxu0
    %v581 = vadd.f32 0.0, %v580
    %582 = vmatmul.bf16.gmra.mxu0 %v470
    %v583 = vpop.f32.mrf.mxu0
    %v584 = vadd.f32 0.0, %v583
    %v585 = vpop.f32.mrf.mxu0
    %v586 = vadd.f32 0.0, %v585
    %587 = vmatmul.bf16.gmra.mxu0 %v471
    %v588 = vpop.f32.mrf.mxu0
    %v589 = vadd.f32 0.0, %v588
    %v590 = vpop.f32.mrf.mxu0
    %v591 = vadd.f32 0.0, %v590
    %592 = vmatmul.bf16.gmra.mxu0 %v472
    %v593 = vpop.f32.mrf.mxu0
    %v594 = vadd.f32 0.0, %v593
    %v595 = vpop.f32.mrf.mxu0
    %v596 = vadd.f32 0.0, %v595
    %597 = vmatmul.bf16.gmra.mxu0 %v473
    %v598 = vpop.f32.mrf.mxu0
    %v599 = vadd.f32 0.0, %v598
    %v600 = vpop.f32.mrf.mxu0
    %v601 = vadd.f32 0.0, %v600
    %602 = vmatmul.bf16.gmra.mxu0 %v474
    %v603 = vpop.f32.mrf.mxu0
    %v604 = vadd.f32 0.0, %v603
    %v605 = vpop.f32.mrf.mxu0
    %v606 = vadd.f32 0.0, %v605
    %607 = vmatmul.bf16.gmra.mxu0 %v475
    %v608 = vpop.f32.mrf.mxu0
    %v609 = vadd.f32 0.0, %v608
    %v610 = vpop.f32.mrf.mxu0
    %v611 = vadd.f32 0.0, %v610
    %612 = vmatmul.bf16.gmra.mxu0 %v476
    %v613 = vpop.f32.mrf.mxu0
    %v614 = vadd.f32 0.0, %v613
    %v615 = vpop.f32.mrf.mxu0
    %v616 = vadd.f32 0.0, %v615
    %617 = vmatmul.bf16.gmra.mxu0 %v477
    %v618 = vpop.f32.mrf.mxu0
    %v619 = vadd.f32 0.0, %v618
    %v620 = vpop.f32.mrf.mxu0
    %v621 = vadd.f32 0.0, %v620
    %622 = vmatmul.bf16.gmra.mxu0 %v478
    %v623 = vpop.f32.mrf.mxu0
    %v624 = vadd.f32 0.0, %v623
    %v625 = vpop.f32.mrf.mxu0
    %v626 = vadd.f32 0.0, %v625
    %627 = vmatmul.bf16.gmra.mxu0 %v479
    %v628 = vpop.f32.mrf.mxu0
    %v629 = vadd.f32 0.0, %v628
    %v630 = vpop.f32.mrf.mxu0
    %v631 = vadd.f32 0.0, %v630
    %632 = vmatmul.bf16.gmra.mxu0 %v480
    %v633 = vpop.f32.mrf.mxu0
    %v634 = vadd.f32 0.0, %v633
    %v635 = vpop.f32.mrf.mxu0
    %v636 = vadd.f32 0.0, %v635
    %637 = vmatmul.bf16.gmra.mxu0 %v481
    %v638 = vpop.f32.mrf.mxu0
    %v639 = vadd.f32 0.0, %v638
    %v640 = vpop.f32.mrf.mxu0
    %v641 = vadd.f32 0.0, %v640
    %642 = vmatmul.bf16.gmra.mxu0 %v482
    %v643 = vpop.f32.mrf.mxu0
    %v644 = vadd.f32 0.0, %v643
    %v645 = vpop.f32.mrf.mxu0
    %v646 = vadd.f32 0.0, %v645
    %647 = vmatmul.bf16.gmra.mxu0 %v483
    %v648 = vpop.f32.mrf.mxu0
    %v649 = vadd.f32 0.0, %v648
    %v650 = vpop.f32.mrf.mxu0
    %v651 = vadd.f32 0.0, %v650
    %652 = vmatmul.bf16.gmra.mxu0 %v484
    %v653 = vpop.f32.mrf.mxu0
    %v654 = vadd.f32 0.0, %v653
    %v655 = vpop.f32.mrf.mxu0
    %v656 = vadd.f32 0.0, %v655
    %657 = vmatmul.bf16.gmra.mxu0 %v485
    %v658 = vpop.f32.mrf.mxu0
    %v659 = vadd.f32 0.0, %v658
    %v660 = vpop.f32.mrf.mxu0
    %v661 = vadd.f32 0.0, %v660
    %662 = vmatmul.bf16.gmra.mxu0 %v486
    %v663 = vpop.f32.mrf.mxu0
    %v664 = vadd.f32 0.0, %v663
    %v665 = vpop.f32.mrf.mxu0
    %v666 = vadd.f32 0.0, %v665
    %667 = vmatmul.bf16.gmra.mxu0 %v487
    %v668 = vpop.f32.mrf.mxu0
    %v669 = vadd.f32 0.0, %v668
    %v670 = vpop.f32.mrf.mxu0
    %v671 = vadd.f32 0.0, %v670
    %672 = vmatmul.bf16.gmra.mxu0 %v488
    %v673 = vpop.f32.mrf.mxu0
    %v674 = vadd.f32 0.0, %v673
    %v675 = vpop.f32.mrf.mxu0
    %v676 = vadd.f32 0.0, %v675
    %677 = vmatmul.bf16.gmra.mxu0 %v489
    %v678 = vpop.f32.mrf.mxu0
    %v679 = vadd.f32 0.0, %v678
    %v680 = vpop.f32.mrf.mxu0
    %v681 = vadd.f32 0.0, %v680
    %682 = vmatmul.bf16.gmra.mxu0 %v490
    %v683 = vpop.f32.mrf.mxu0
    %v684 = vadd.f32 0.0, %v683
    %v685 = vpop.f32.mrf.mxu0
    %v686 = vadd.f32 0.0, %v685
    %687 = vmatmul.bf16.gmra.mxu0 %v491
    %v688 = vpop.f32.mrf.mxu0
    %v689 = vadd.f32 0.0, %v688
    %v690 = vpop.f32.mrf.mxu0
    %v691 = vadd.f32 0.0, %v690
    %692 = vmatmul.bf16.gmra.mxu0 %v492
    %v693 = vpop.f32.mrf.mxu0
    %v694 = vadd.f32 0.0, %v693
    %v695 = vpop.f32.mrf.mxu0
    %v696 = vadd.f32 0.0, %v695
    %697 = vmatmul.bf16.gmra.mxu0 %v493
    %v698 = vpop.f32.mrf.mxu0
    %v699 = vadd.f32 0.0, %v698
    %v700 = vpop.f32.mrf.mxu0
    %v701 = vadd.f32 0.0, %v700
    %702 = vmatmul.bf16.gmra.mxu0 %v494
    %v703 = vpop.f32.mrf.mxu0
    %v704 = vadd.f32 0.0, %v703
    %v705 = vpop.f32.mrf.mxu0
    %v706 = vadd.f32 0.0, %v705
    %707 = vmatmul.bf16.gmra.mxu0 %v495
    %v708 = vpop.f32.mrf.mxu0
    %v709 = vadd.f32 0.0, %v708
    %v710 = vpop.f32.mrf.mxu0
    %v711 = vadd.f32 0.0, %v710
    %712 = vmatmul.bf16.gmra.mxu0 %v496
    %v713 = vpop.f32.mrf.mxu0
    %v714 = vadd.f32 0.0, %v713
    %v715 = vpop.f32.mrf.mxu0
    %v716 = vadd.f32 0.0, %v715
    %717 = vmatmul.bf16.gmra.mxu0 %v497
    %v718 = vpop.f32.mrf.mxu0
    %v719 = vadd.f32 0.0, %v718
    %v720 = vpop.f32.mrf.mxu0
    %v721 = vadd.f32 0.0, %v720
    %722 = vmatmul.bf16.gmra.mxu0 %v498
    %v723 = vpop.f32.mrf.mxu0
    %v724 = vadd.f32 0.0, %v723
    %v725 = vpop.f32.mrf.mxu0
    %v726 = vadd.f32 0.0, %v725
    %727 = vmatmul.bf16.gmra.mxu0 %v499
    %v728 = vpop.f32.mrf.mxu0
    %v729 = vadd.f32 0.0, %v728
    %v730 = vpop.f32.mrf.mxu0
    %v731 = vadd.f32 0.0, %v730
    %732 = vdwg.mxu0
    %v733 = vmul.f32 %v574, 0.5
    %v734 = vmul.f32 %v576, 0.5
    %v735 = vmul.f32 %v579, 0.5
    %v736 = vmul.f32 %v581, 0.5
    %v737 = vmul.f32 %v584, 0.5
    %v738 = vmul.f32 %v586, 0.5
    %v739 = vmul.f32 %v589, 0.5
    %v740 = vmul.f32 %v591, 0.5
    %v741 = vmul.f32 %v594, 0.5
    %v742 = vmul.f32 %v596, 0.5
    %v743 = vmul.f32 %v599, 0.5
    %v744 = vmul.f32 %v601, 0.5
    %v745 = vmul.f32 %v604, 0.5
    %v746 = vmul.f32 %v606, 0.5
    %v747 = vmul.f32 %v609, 0.5
    %v748 = vmul.f32 %v611, 0.5
    %v749 = vmul.f32 %v614, 0.5
    %v750 = vmul.f32 %v616, 0.5
    %v751 = vmul.f32 %v619, 0.5
    %v752 = vmul.f32 %v621, 0.5
    %v753 = vmul.f32 %v624, 0.5
    %v754 = vmul.f32 %v626, 0.5
    %v755 = vmul.f32 %v629, 0.5
    %v756 = vmul.f32 %v631, 0.5
    %v757 = vmul.f32 %v634, 0.5
    %v758 = vmul.f32 %v636, 0.5
    %v759 = vmul.f32 %v639, 0.5
    %v760 = vmul.f32 %v641, 0.5
    %v761 = vmul.f32 %v644, 0.5
    %v762 = vmul.f32 %v646, 0.5
    %v763 = vmul.f32 %v649, 0.5
    %v764 = vmul.f32 %v651, 0.5
    %v765 = vmul.f32 %v654, 0.5
    %v766 = vmul.f32 %v656, 0.5
    %v767 = vmul.f32 %v659, 0.5
    %v768 = vmul.f32 %v661, 0.5
    %v769 = vmul.f32 %v664, 0.5
    %v770 = vmul.f32 %v666, 0.5
    %v771 = vmul.f32 %v669, 0.5
    %v772 = vmul.f32 %v671, 0.5
    %v773 = vmul.f32 %v674, 0.5
    %v774 = vmul.f32 %v676, 0.5
    %v775 = vmul.f32 %v679, 0.5
    %v776 = vmul.f32 %v681, 0.5
    %v777 = vmul.f32 %v684, 0.5
    %v778 = vmul.f32 %v686, 0.5
    %v779 = vmul.f32 %v689, 0.5
    %v780 = vmul.f32 %v691, 0.5
    %v781 = vmul.f32 %v694, 0.5
    %v782 = vmul.f32 %v696, 0.5
    %v783 = vmul.f32 %v699, 0.5
    %v784 = vmul.f32 %v701, 0.5
    %v785 = vmul.f32 %v704, 0.5
    %v786 = vmul.f32 %v706, 0.5
    %v787 = vmul.f32 %v709, 0.5
    %v788 = vmul.f32 %v711, 0.5
    %v789 = vmul.f32 %v714, 0.5
    %v790 = vmul.f32 %v716, 0.5
    %v791 = vmul.f32 %v719, 0.5
    %v792 = vmul.f32 %v721, 0.5
    %v793 = vmul.f32 %v724, 0.5
    %v794 = vmul.f32 %v726, 0.5
    %v795 = vmul.f32 %v729, 0.5
    %v796 = vmul.f32 %v731, 0.5
    %v797 = vmul.f32 %v574, %v574
    %v798 = vmul.f32 %v576, %v576
    %v799 = vmul.f32 %v579, %v579
    %v800 = vmul.f32 %v581, %v581
    %v801 = vmul.f32 %v584, %v584
    %v802 = vmul.f32 %v586, %v586
    %v803 = vmul.f32 %v589, %v589
    %v804 = vmul.f32 %v591, %v591
    %v805 = vmul.f32 %v594, %v594
    %v806 = vmul.f32 %v596, %v596
    %v807 = vmul.f32 %v599, %v599
    %v808 = vmul.f32 %v601, %v601
    %v809 = vmul.f32 %v604, %v604
    %v810 = vmul.f32 %v606, %v606
    %v811 = vmul.f32 %v609, %v609
    %v812 = vmul.f32 %v611, %v611
    %v813 = vmul.f32 %v614, %v614
    %v814 = vmul.f32 %v616, %v616
    %v815 = vmul.f32 %v619, %v619
    %v816 = vmul.f32 %v621, %v621
    %v817 = vmul.f32 %v624, %v624
    %v818 = vmul.f32 %v626, %v626
    %v819 = vmul.f32 %v629, %v629
    %v820 = vmul.f32 %v631, %v631
    %v821 = vmul.f32 %v634, %v634
    %v822 = vmul.f32 %v636, %v636
    %v823 = vmul.f32 %v639, %v639
    %v824 = vmul.f32 %v641, %v641
    %v825 = vmul.f32 %v644, %v644
    %v826 = vmul.f32 %v646, %v646
    %v827 = vmul.f32 %v649, %v649
    %v828 = vmul.f32 %v651, %v651
    %v829 = vmul.f32 %v654, %v654
    %v830 = vmul.f32 %v656, %v656
    %v831 = vmul.f32 %v659, %v659
    %v832 = vmul.f32 %v661, %v661
    %v833 = vmul.f32 %v664, %v664
    %v834 = vmul.f32 %v666, %v666
    %v835 = vmul.f32 %v669, %v669
    %v836 = vmul.f32 %v671, %v671
    %v837 = vmul.f32 %v674, %v674
    %v838 = vmul.f32 %v676, %v676
    %v839 = vmul.f32 %v679, %v679
    %v840 = vmul.f32 %v681, %v681
    %v841 = vmul.f32 %v684, %v684
    %v842 = vmul.f32 %v686, %v686
    %v843 = vmul.f32 %v689, %v689
    %v844 = vmul.f32 %v691, %v691
    %v845 = vmul.f32 %v694, %v694
    %v846 = vmul.f32 %v696, %v696
    %v847 = vmul.f32 %v699, %v699
    %v848 = vmul.f32 %v701, %v701
    %v849 = vmul.f32 %v704, %v704
    %v850 = vmul.f32 %v706, %v706
    %v851 = vmul.f32 %v709, %v709
    %v852 = vmul.f32 %v711, %v711
    %v853 = vmul.f32 %v714, %v714
    %v854 = vmul.f32 %v716, %v716
    %v855 = vmul.f32 %v719, %v719
    %v856 = vmul.f32 %v721, %v721
    %v857 = vmul.f32 %v724, %v724
    %v858 = vmul.f32 %v726, %v726
    %v859 = vmul.f32 %v729, %v729
    %v860 = vmul.f32 %v731, %v731
    %v861 = vmul.f32 %v797, %v574
    %v862 = vmul.f32 %v798, %v576
    %v863 = vmul.f32 %v799, %v579
    %v864 = vmul.f32 %v800, %v581
    %v865 = vmul.f32 %v801, %v584
    %v866 = vmul.f32 %v802, %v586
    %v867 = vmul.f32 %v803, %v589
    %v868 = vmul.f32 %v804, %v591
    %v869 = vmul.f32 %v805, %v594
    %v870 = vmul.f32 %v806, %v596
    %v871 = vmul.f32 %v807, %v599
    %v872 = vmul.f32 %v808, %v601
    %v873 = vmul.f32 %v809, %v604
    %v874 = vmul.f32 %v810, %v606
    %v875 = vmul.f32 %v811, %v609
    %v876 = vmul.f32 %v812, %v611
    %v877 = vmul.f32 %v813, %v614
    %v878 = vmul.f32 %v814, %v616
    %v879 = vmul.f32 %v815, %v619
    %v880 = vmul.f32 %v816, %v621
    %v881 = vmul.f32 %v817, %v624
    %v882 = vmul.f32 %v818, %v626
    %v883 = vmul.f32 %v819, %v629
    %v884 = vmul.f32 %v820, %v631
    %v885 = vmul.f32 %v821, %v634
    %v886 = vmul.f32 %v822, %v636
    %v887 = vmul.f32 %v823, %v639
    %v888 = vmul.f32 %v824, %v641
    %v889 = vmul.f32 %v825, %v644
    %v890 = vmul.f32 %v826, %v646
    %v891 = vmul.f32 %v827, %v649
    %v892 = vmul.f32 %v828, %v651
    %v893 = vmul.f32 %v829, %v654
    %v894 = vmul.f32 %v830, %v656
    %v895 = vmul.f32 %v831, %v659
    %v896 = vmul.f32 %v832, %v661
    %v897 = vmul.f32 %v833, %v664
    %v898 = vmul.f32 %v834, %v666
    %v899 = vmul.f32 %v835, %v669
    %v900 = vmul.f32 %v836, %v671
    %v901 = vmul.f32 %v837, %v674
    %v902 = vmul.f32 %v838, %v676
    %v903 = vmul.f32 %v839, %v679
    %v904 = vmul.f32 %v840, %v681
    %v905 = vmul.f32 %v841, %v684
    %v906 = vmul.f32 %v842, %v686
    %v907 = vmul.f32 %v843, %v689
    %v908 = vmul.f32 %v844, %v691
    %v909 = vmul.f32 %v845, %v694
    %v910 = vmul.f32 %v846, %v696
    %v911 = vmul.f32 %v847, %v699
    %v912 = vmul.f32 %v848, %v701
    %v913 = vmul.f32 %v849, %v704
    %v914 = vmul.f32 %v850, %v706
    %v915 = vmul.f32 %v851, %v709
    %v916 = vmul.f32 %v852, %v711
    %v917 = vmul.f32 %v853, %v714
    %v918 = vmul.f32 %v854, %v716
    %v919 = vmul.f32 %v855, %v719
    %v920 = vmul.f32 %v856, %v721
    %v921 = vmul.f32 %v857, %v724
    %v922 = vmul.f32 %v858, %v726
    %v923 = vmul.f32 %v859, %v729
    %v924 = vmul.f32 %v860, %v731
    %v925 = vmul.f32 %v861, 0.044715
    %v926 = vmul.f32 %v862, 0.044715
    %v927 = vmul.f32 %v863, 0.044715
    %v928 = vmul.f32 %v864, 0.044715
    %v929 = vmul.f32 %v865, 0.044715
    %v930 = vmul.f32 %v866, 0.044715
    %v931 = vmul.f32 %v867, 0.044715
    %v932 = vmul.f32 %v868, 0.044715
    %v933 = vmul.f32 %v869, 0.044715
    %v934 = vmul.f32 %v870, 0.044715
    %v935 = vmul.f32 %v871, 0.044715
    %v936 = vmul.f32 %v872, 0.044715
    %v937 = vmul.f32 %v873, 0.044715
    %v938 = vmul.f32 %v874, 0.044715
    %v939 = vmul.f32 %v875, 0.044715
    %v940 = vmul.f32 %v876, 0.044715
    %v941 = vmul.f32 %v877, 0.044715
    %v942 = vmul.f32 %v878, 0.044715
    %v943 = vmul.f32 %v879, 0.044715
    %v944 = vmul.f32 %v880, 0.044715
    %v945 = vmul.f32 %v881, 0.044715
    %v946 = vmul.f32 %v882, 0.044715
    %v947 = vmul.f32 %v883, 0.044715
    %v948 = vmul.f32 %v884, 0.044715
    %v949 = vmul.f32 %v885, 0.044715
    %v950 = vmul.f32 %v886, 0.044715
    %v951 = vmul.f32 %v887, 0.044715
    %v952 = vmul.f32 %v888, 0.044715
    %v953 = vmul.f32 %v889, 0.044715
    %v954 = vmul.f32 %v890, 0.044715
    %v955 = vmul.f32 %v891, 0.044715
    %v956 = vmul.f32 %v892, 0.044715
    %v957 = vmul.f32 %v893, 0.044715
    %v958 = vmul.f32 %v894, 0.044715
    %v959 = vmul.f32 %v895, 0.044715
    %v960 = vmul.f32 %v896, 0.044715
    %v961 = vmul.f32 %v897, 0.044715
    %v962 = vmul.f32 %v898, 0.044715
    %v963 = vmul.f32 %v899, 0.044715
    %v964 = vmul.f32 %v900, 0.044715
    %v965 = vmul.f32 %v901, 0.044715
    %v966 = vmul.f32 %v902, 0.044715
    %v967 = vmul.f32 %v903, 0.044715
    %v968 = vmul.f32 %v904, 0.044715
    %v969 = vmul.f32 %v905, 0.044715
    %v970 = vmul.f32 %v906, 0.044715
    %v971 = vmul.f32 %v907, 0.044715
    %v972 = vmul.f32 %v908, 0.044715
    %v973 = vmul.f32 %v909, 0.044715
    %v974 = vmul.f32 %v910, 0.044715
    %v975 = vmul.f32 %v911, 0.044715
    %v976 = vmul.f32 %v912, 0.044715
    %v977 = vmul.f32 %v913, 0.044715
    %v978 = vmul.f32 %v914, 0.044715
    %v979 = vmul.f32 %v915, 0.044715
    %v980 = vmul.f32 %v916, 0.044715
    %v981 = vmul.f32 %v917, 0.044715
    %v982 = vmul.f32 %v918, 0.044715
    %v983 = vmul.f32 %v919, 0.044715
    %v984 = vmul.f32 %v920, 0.044715
    %v985 = vmul.f32 %v921, 0.044715
    %v986 = vmul.f32 %v922, 0.044715
    %v987 = vmul.f32 %v923, 0.044715
    %v988 = vmul.f32 %v924, 0.044715
    %v989 = vadd.f32 %v574, %v925
    %v990 = vadd.f32 %v576, %v926
    %v991 = vadd.f32 %v579, %v927
    %v992 = vadd.f32 %v581, %v928
    %v993 = vadd.f32 %v584, %v929
    %v994 = vadd.f32 %v586, %v930
    %v995 = vadd.f32 %v589, %v931
    %v996 = vadd.f32 %v591, %v932
    %v997 = vadd.f32 %v594, %v933
    %v998 = vadd.f32 %v596, %v934
    %v999 = vadd.f32 %v599, %v935
    %v1000 = vadd.f32 %v601, %v936
    %v1001 = vadd.f32 %v604, %v937
    %v1002 = vadd.f32 %v606, %v938
    %v1003 = vadd.f32 %v609, %v939
    %v1004 = vadd.f32 %v611, %v940
    %v1005 = vadd.f32 %v614, %v941
    %v1006 = vadd.f32 %v616, %v942
    %v1007 = vadd.f32 %v619, %v943
    %v1008 = vadd.f32 %v621, %v944
    %v1009 = vadd.f32 %v624, %v945
    %v1010 = vadd.f32 %v626, %v946
    %v1011 = vadd.f32 %v629, %v947
    %v1012 = vadd.f32 %v631, %v948
    %v1013 = vadd.f32 %v634, %v949
    %v1014 = vadd.f32 %v636, %v950
    %v1015 = vadd.f32 %v639, %v951
    %v1016 = vadd.f32 %v641, %v952
    %v1017 = vadd.f32 %v644, %v953
    %v1018 = vadd.f32 %v646, %v954
    %v1019 = vadd.f32 %v649, %v955
    %v1020 = vadd.f32 %v651, %v956
    %v1021 = vadd.f32 %v654, %v957
    %v1022 = vadd.f32 %v656, %v958
    %v1023 = vadd.f32 %v659, %v959
    %v1024 = vadd.f32 %v661, %v960
    %v1025 = vadd.f32 %v664, %v961
    %v1026 = vadd.f32 %v666, %v962
    %v1027 = vadd.f32 %v669, %v963
    %v1028 = vadd.f32 %v671, %v964
    %v1029 = vadd.f32 %v674, %v965
    %v1030 = vadd.f32 %v676, %v966
    %v1031 = vadd.f32 %v679, %v967
    %v1032 = vadd.f32 %v681, %v968
    %v1033 = vadd.f32 %v684, %v969
    %v1034 = vadd.f32 %v686, %v970
    %v1035 = vadd.f32 %v689, %v971
    %v1036 = vadd.f32 %v691, %v972
    %v1037 = vadd.f32 %v694, %v973
    %v1038 = vadd.f32 %v696, %v974
    %v1039 = vadd.f32 %v699, %v975
    %v1040 = vadd.f32 %v701, %v976
    %v1041 = vadd.f32 %v704, %v977
    %v1042 = vadd.f32 %v706, %v978
    %v1043 = vadd.f32 %v709, %v979
    %v1044 = vadd.f32 %v711, %v980
    %v1045 = vadd.f32 %v714, %v981
    %v1046 = vadd.f32 %v716, %v982
    %v1047 = vadd.f32 %v719, %v983
    %v1048 = vadd.f32 %v721, %v984
    %v1049 = vadd.f32 %v724, %v985
    %v1050 = vadd.f32 %v726, %v986
    %v1051 = vadd.f32 %v729, %v987
    %v1052 = vadd.f32 %v731, %v988
    %v1053 = vmul.f32 %v989, 0.7978846
    %v1054 = vmul.f32 %v990, 0.7978846
    %v1055 = vmul.f32 %v991, 0.7978846
    %v1056 = vmul.f32 %v992, 0.7978846
    %v1057 = vmul.f32 %v993, 0.7978846
    %v1058 = vmul.f32 %v994, 0.7978846
    %v1059 = vmul.f32 %v995, 0.7978846
    %v1060 = vmul.f32 %v996, 0.7978846
    %v1061 = vmul.f32 %v997, 0.7978846
    %v1062 = vmul.f32 %v998, 0.7978846
    %v1063 = vmul.f32 %v999, 0.7978846
    %v1064 = vmul.f32 %v1000, 0.7978846
    %v1065 = vmul.f32 %v1001, 0.7978846
    %v1066 = vmul.f32 %v1002, 0.7978846
    %v1067 = vmul.f32 %v1003, 0.7978846
    %v1068 = vmul.f32 %v1004, 0.7978846
    %v1069 = vmul.f32 %v1005, 0.7978846
    %v1070 = vmul.f32 %v1006, 0.7978846
    %v1071 = vmul.f32 %v1007, 0.7978846
    %v1072 = vmul.f32 %v1008, 0.7978846
    %v1073 = vmul.f32 %v1009, 0.7978846
    %v1074 = vmul.f32 %v1010, 0.7978846
    %v1075 = vmul.f32 %v1011, 0.7978846
    %v1076 = vmul.f32 %v1012, 0.7978846
    %v1077 = vmul.f32 %v1013, 0.7978846
    %v1078 = vmul.f32 %v1014, 0.7978846
    %v1079 = vmul.f32 %v1015, 0.7978846
    %v1080 = vmul.f32 %v1016, 0.7978846
    %v1081 = vmul.f32 %v1017, 0.7978846
    %v1082 = vmul.f32 %v1018, 0.7978846
    %v1083 = vmul.f32 %v1019, 0.7978846
    %v1084 = vmul.f32 %v1020, 0.7978846
    %v1085 = vmul.f32 %v1021, 0.7978846
    %v1086 = vmul.f32 %v1022, 0.7978846
    %v1087 = vmul.f32 %v1023, 0.7978846
    %v1088 = vmul.f32 %v1024, 0.7978846
    %v1089 = vmul.f32 %v1025, 0.7978846
    %v1090 = vmul.f32 %v1026, 0.7978846
    %v1091 = vmul.f32 %v1027, 0.7978846
    %v1092 = vmul.f32 %v1028, 0.7978846
    %v1093 = vmul.f32 %v1029, 0.7978846
    %v1094 = vmul.f32 %v1030, 0.7978846
    %v1095 = vmul.f32 %v1031, 0.7978846
    %v1096 = vmul.f32 %v1032, 0.7978846
    %v1097 = vmul.f32 %v1033, 0.7978846
    %v1098 = vmul.f32 %v1034, 0.7978846
    %v1099 = vmul.f32 %v1035, 0.7978846
    %v1100 = vmul.f32 %v1036, 0.7978846
    %v1101 = vmul.f32 %v1037, 0.7978846
    %v1102 = vmul.f32 %v1038, 0.7978846
    %v1103 = vmul.f32 %v1039, 0.7978846
    %v1104 = vmul.f32 %v1040, 0.7978846
    %v1105 = vmul.f32 %v1041, 0.7978846
    %v1106 = vmul.f32 %v1042, 0.7978846
    %v1107 = vmul.f32 %v1043, 0.7978846
    %v1108 = vmul.f32 %v1044, 0.7978846
    %v1109 = vmul.f32 %v1045, 0.7978846
    %v1110 = vmul.f32 %v1046, 0.7978846
    %v1111 = vmul.f32 %v1047, 0.7978846
    %v1112 = vmul.f32 %v1048, 0.7978846
    %v1113 = vmul.f32 %v1049, 0.7978846
    %v1114 = vmul.f32 %v1050, 0.7978846
    %v1115 = vmul.f32 %v1051, 0.7978846
    %v1116 = vmul.f32 %v1052, 0.7978846
    %v1117 = vtanh.pop %v1053
    %v1118 = vtanh.pop %v1054
    %v1119 = vtanh.pop %v1055
    %v1120 = vtanh.pop %v1056
    %v1121 = vtanh.pop %v1057
    %v1122 = vtanh.pop %v1058
    %v1123 = vtanh.pop %v1059
    %v1124 = vtanh.pop %v1060
    %v1125 = vtanh.pop %v1061
    %v1126 = vtanh.pop %v1062
    %v1127 = vtanh.pop %v1063
    %v1128 = vtanh.pop %v1064
    %v1129 = vtanh.pop %v1065
    %v1130 = vtanh.pop %v1066
    %v1131 = vtanh.pop %v1067
    %v1132 = vtanh.pop %v1068
    %v1133 = vtanh.pop %v1069
    %v1134 = vtanh.pop %v1070
    %v1135 = vtanh.pop %v1071
    %v1136 = vtanh.pop %v1072
    %v1137 = vtanh.pop %v1073
    %v1138 = vtanh.pop %v1074
    %v1139 = vtanh.pop %v1075
    %v1140 = vtanh.pop %v1076
    %v1141 = vtanh.pop %v1077
    %v1142 = vtanh.pop %v1078
    %v1143 = vtanh.pop %v1079
    %v1144 = vtanh.pop %v1080
    %v1145 = vtanh.pop %v1081
    %v1146 = vtanh.pop %v1082
    %v1147 = vtanh.pop %v1083
    %v1148 = vtanh.pop %v1084
    %v1149 = vtanh.pop %v1085
    %v1150 = vtanh.pop %v1086
    %v1151 = vtanh.pop %v1087
    %v1152 = vtanh.pop %v1088
    %v1153 = vtanh.pop %v1089
    %v1154 = vtanh.pop %v1090
    %v1155 = vtanh.pop %v1091
    %v1156 = vtanh.pop %v1092
    %v1157 = vtanh.pop %v1093
    %v1158 = vtanh.pop %v1094
    %v1159 = vtanh.pop %v1095
    %v1160 = vtanh.pop %v1096
    %v1161 = vtanh.pop %v1097
    %v1162 = vtanh.pop %v1098
    %v1163 = vtanh.pop %v1099
    %v1164 = vtanh.pop %v1100
    %v1165 = vtanh.pop %v1101
    %v1166 = vtanh.pop %v1102
    %v1167 = vtanh.pop %v1103
    %v1168 = vtanh.pop %v1104
    %v1169 = vtanh.pop %v1105
    %v1170 = vtanh.pop %v1106
    %v1171 = vtanh.pop %v1107
    %v1172 = vtanh.pop %v1108
    %v1173 = vtanh.pop %v1109
    %v1174 = vtanh.pop %v1110
    %v1175 = vtanh.pop %v1111
    %v1176 = vtanh.pop %v1112
    %v1177 = vtanh.pop %v1113
    %v1178 = vtanh.pop %v1114
    %v1179 = vtanh.pop %v1115
    %v1180 = vtanh.pop %v1116
    %v1181 = vadd.f32 %v1117, 1.0
    %v1182 = vadd.f32 %v1118, 1.0
    %v1183 = vadd.f32 %v1119, 1.0
    %v1184 = vadd.f32 %v1120, 1.0
    %v1185 = vadd.f32 %v1121, 1.0
    %v1186 = vadd.f32 %v1122, 1.0
    %v1187 = vadd.f32 %v1123, 1.0
    %v1188 = vadd.f32 %v1124, 1.0
    %v1189 = vadd.f32 %v1125, 1.0
    %v1190 = vadd.f32 %v1126, 1.0
    %v1191 = vadd.f32 %v1127, 1.0
    %v1192 = vadd.f32 %v1128, 1.0
    %v1193 = vadd.f32 %v1129, 1.0
    %v1194 = vadd.f32 %v1130, 1.0
    %v1195 = vadd.f32 %v1131, 1.0
    %v1196 = vadd.f32 %v1132, 1.0
    %v1197 = vadd.f32 %v1133, 1.0
    %v1198 = vadd.f32 %v1134, 1.0
    %v1199 = vadd.f32 %v1135, 1.0
    %v1200 = vadd.f32 %v1136, 1.0
    %v1201 = vadd.f32 %v1137, 1.0
    %v1202 = vadd.f32 %v1138, 1.0
    %v1203 = vadd.f32 %v1139, 1.0
    %v1204 = vadd.f32 %v1140, 1.0
    %v1205 = vadd.f32 %v1141, 1.0
    %v1206 = vadd.f32 %v1142, 1.0
    %v1207 = vadd.f32 %v1143, 1.0
    %v1208 = vadd.f32 %v1144, 1.0
    %v1209 = vadd.f32 %v1145, 1.0
    %v1210 = vadd.f32 %v1146, 1.0
    %v1211 = vadd.f32 %v1147, 1.0
    %v1212 = vadd.f32 %v1148, 1.0
    %v1213 = vadd.f32 %v1149, 1.0
    %v1214 = vadd.f32 %v1150, 1.0
    %v1215 = vadd.f32 %v1151, 1.0
    %v1216 = vadd.f32 %v1152, 1.0
    %v1217 = vadd.f32 %v1153, 1.0
    %v1218 = vadd.f32 %v1154, 1.0
    %v1219 = vadd.f32 %v1155, 1.0
    %v1220 = vadd.f32 %v1156, 1.0
    %v1221 = vadd.f32 %v1157, 1.0
    %v1222 = vadd.f32 %v1158, 1.0
    %v1223 = vadd.f32 %v1159, 1.0
    %v1224 = vadd.f32 %v1160, 1.0
    %v1225 = vadd.f32 %v1161, 1.0
    %v1226 = vadd.f32 %v1162, 1.0
    %v1227 = vadd.f32 %v1163, 1.0
    %v1228 = vadd.f32 %v1164, 1.0
    %v1229 = vadd.f32 %v1165, 1.0
    %v1230 = vadd.f32 %v1166, 1.0
    %v1231 = vadd.f32 %v1167, 1.0
    %v1232 = vadd.f32 %v1168, 1.0
    %v1233 = vadd.f32 %v1169, 1.0
    %v1234 = vadd.f32 %v1170, 1.0
    %v1235 = vadd.f32 %v1171, 1.0
    %v1236 = vadd.f32 %v1172, 1.0
    %v1237 = vadd.f32 %v1173, 1.0
    %v1238 = vadd.f32 %v1174, 1.0
    %v1239 = vadd.f32 %v1175, 1.0
    %v1240 = vadd.f32 %v1176, 1.0
    %v1241 = vadd.f32 %v1177, 1.0
    %v1242 = vadd.f32 %v1178, 1.0
    %v1243 = vadd.f32 %v1179, 1.0
    %v1244 = vadd.f32 %v1180, 1.0
    %v1245 = vmul.f32 %v733, %v1181
    %v1246 = vmul.f32 %v734, %v1182
    %v1247 = vmul.f32 %v735, %v1183
    %v1248 = vmul.f32 %v736, %v1184
    %v1249 = vmul.f32 %v737, %v1185
    %v1250 = vmul.f32 %v738, %v1186
    %v1251 = vmul.f32 %v739, %v1187
    %v1252 = vmul.f32 %v740, %v1188
    %v1253 = vmul.f32 %v741, %v1189
    %v1254 = vmul.f32 %v742, %v1190
    %v1255 = vmul.f32 %v743, %v1191
    %v1256 = vmul.f32 %v744, %v1192
    %v1257 = vmul.f32 %v745, %v1193
    %v1258 = vmul.f32 %v746, %v1194
    %v1259 = vmul.f32 %v747, %v1195
    %v1260 = vmul.f32 %v748, %v1196
    %v1261 = vmul.f32 %v749, %v1197
    %v1262 = vmul.f32 %v750, %v1198
    %v1263 = vmul.f32 %v751, %v1199
    %v1264 = vmul.f32 %v752, %v1200
    %v1265 = vmul.f32 %v753, %v1201
    %v1266 = vmul.f32 %v754, %v1202
    %v1267 = vmul.f32 %v755, %v1203
    %v1268 = vmul.f32 %v756, %v1204
    %v1269 = vmul.f32 %v757, %v1205
    %v1270 = vmul.f32 %v758, %v1206
    %v1271 = vmul.f32 %v759, %v1207
    %v1272 = vmul.f32 %v760, %v1208
    %v1273 = vmul.f32 %v761, %v1209
    %v1274 = vmul.f32 %v762, %v1210
    %v1275 = vmul.f32 %v763, %v1211
    %v1276 = vmul.f32 %v764, %v1212
    %v1277 = vmul.f32 %v765, %v1213
    %v1278 = vmul.f32 %v766, %v1214
    %v1279 = vmul.f32 %v767, %v1215
    %v1280 = vmul.f32 %v768, %v1216
    %v1281 = vmul.f32 %v769, %v1217
    %v1282 = vmul.f32 %v770, %v1218
    %v1283 = vmul.f32 %v771, %v1219
    %v1284 = vmul.f32 %v772, %v1220
    %v1285 = vmul.f32 %v773, %v1221
    %v1286 = vmul.f32 %v774, %v1222
    %v1287 = vmul.f32 %v775, %v1223
    %v1288 = vmul.f32 %v776, %v1224
    %v1289 = vmul.f32 %v777, %v1225
    %v1290 = vmul.f32 %v778, %v1226
    %v1291 = vmul.f32 %v779, %v1227
    %v1292 = vmul.f32 %v780, %v1228
    %v1293 = vmul.f32 %v781, %v1229
    %v1294 = vmul.f32 %v782, %v1230
    %v1295 = vmul.f32 %v783, %v1231
    %v1296 = vmul.f32 %v784, %v1232
    %v1297 = vmul.f32 %v785, %v1233
    %v1298 = vmul.f32 %v786, %v1234
    %v1299 = vmul.f32 %v787, %v1235
    %v1300 = vmul.f32 %v788, %v1236
    %v1301 = vmul.f32 %v789, %v1237
    %v1302 = vmul.f32 %v790, %v1238
    %v1303 = vmul.f32 %v791, %v1239
    %v1304 = vmul.f32 %v792, %v1240
    %v1305 = vmul.f32 %v793, %v1241
    %v1306 = vmul.f32 %v794, %v1242
    %v1307 = vmul.f32 %v795, %v1243
    %v1308 = vmul.f32 %v796, %v1244
    %v1309 = vpack.c.bf16 %v1246, %v1245
    %v1310 = vpack.c.bf16 %v1248, %v1247
    %v1311 = vpack.c.bf16 %v1250, %v1249
    %v1312 = vpack.c.bf16 %v1252, %v1251
    %v1313 = vpack.c.bf16 %v1254, %v1253
    %v1314 = vpack.c.bf16 %v1256, %v1255
    %v1315 = vpack.c.bf16 %v1258, %v1257
    %v1316 = vpack.c.bf16 %v1260, %v1259
    %v1317 = vpack.c.bf16 %v1262, %v1261
    %v1318 = vpack.c.bf16 %v1264, %v1263
    %v1319 = vpack.c.bf16 %v1266, %v1265
    %v1320 = vpack.c.bf16 %v1268, %v1267
    %v1321 = vpack.c.bf16 %v1270, %v1269
    %v1322 = vpack.c.bf16 %v1272, %v1271
    %v1323 = vpack.c.bf16 %v1274, %v1273
    %v1324 = vpack.c.bf16 %v1276, %v1275
    %v1325 = vpack.c.bf16 %v1278, %v1277
    %v1326 = vpack.c.bf16 %v1280, %v1279
    %v1327 = vpack.c.bf16 %v1282, %v1281
    %v1328 = vpack.c.bf16 %v1284, %v1283
    %v1329 = vpack.c.bf16 %v1286, %v1285
    %v1330 = vpack.c.bf16 %v1288, %v1287
    %v1331 = vpack.c.bf16 %v1290, %v1289
    %v1332 = vpack.c.bf16 %v1292, %v1291
    %v1333 = vpack.c.bf16 %v1294, %v1293
    %v1334 = vpack.c.bf16 %v1296, %v1295
    %v1335 = vpack.c.bf16 %v1298, %v1297
    %v1336 = vpack.c.bf16 %v1300, %v1299
    %v1337 = vpack.c.bf16 %v1302, %v1301
    %v1338 = vpack.c.bf16 %v1304, %v1303
    %v1339 = vpack.c.bf16 %v1306, %v1305
    %v1340 = vpack.c.bf16 %v1308, %v1307
    %v1341 = vld [vmem:[%s2] sm:$0xf]
    %v1342 = vld [vmem:[%s2 + $0x4] sm:$0xf]
    %v1343 = vld [vmem:[%s2 + $0x8] sm:$0xf]
    %v1344 = vld [vmem:[%s2 + $0xc] sm:$0xf]
    %v1345 = vld [vmem:[%s2 + $0x10] sm:$0xf]
    %v1346 = vld [vmem:[%s2 + $0x14] sm:$0xf]
    %v1347 = vld [vmem:[%s2 + $0x18] sm:$0xf]
    %v1348 = vld [vmem:[%s2 + $0x1c] sm:$0xf]
    %v1349 = vld [vmem:[%s2 + $0x20] sm:$0xf]
    %v1350 = vld [vmem:[%s2 + $0x24] sm:$0xf]
    %v1351 = vld [vmem:[%s2 + $0x28] sm:$0xf]
    %v1352 = vld [vmem:[%s2 + $0x2c] sm:$0xf]
    %v1353 = vld [vmem:[%s2 + $0x30] sm:$0xf]
    %v1354 = vld [vmem:[%s2 + $0x34] sm:$0xf]
    %v1355 = vld [vmem:[%s2 + $0x38] sm:$0xf]
    %v1356 = vld [vmem:[%s2 + $0x3c] sm:$0xf]
    %v1357 = vld [vmem:[%s3] sm:$0x1]
    %v1359 = vperm.slane %v1357, 0
    %v1377 = vunpack.c.l.b16 %v1341
    %v1378 = vunpack.c.l.b16 %v1342
    %v1379 = vunpack.c.l.b16 %v1343
    %v1380 = vunpack.c.l.b16 %v1344
    %v1381 = vunpack.c.l.b16 %v1345
    %v1382 = vunpack.c.l.b16 %v1346
    %v1383 = vunpack.c.l.b16 %v1347
    %v1384 = vunpack.c.l.b16 %v1348
    %v1385 = vunpack.c.l.b16 %v1349
    %v1386 = vunpack.c.l.b16 %v1350
    %v1387 = vunpack.c.l.b16 %v1351
    %v1388 = vunpack.c.l.b16 %v1352
    %v1389 = vunpack.c.l.b16 %v1353
    %v1390 = vunpack.c.l.b16 %v1354
    %v1391 = vunpack.c.l.b16 %v1355
    %v1392 = vunpack.c.l.b16 %v1356
    %v1393 = vpack.c.b16 %v1378, %v1377
    %v1394 = vpack.c.b16 %v1380, %v1379
    %v1395 = vpack.c.b16 %v1382, %v1381
    %v1396 = vpack.c.b16 %v1384, %v1383
    %v1397 = vpack.c.b16 %v1386, %v1385
    %v1398 = vpack.c.b16 %v1388, %v1387
    %v1399 = vpack.c.b16 %v1390, %v1389
    %v1400 = vpack.c.b16 %v1392, %v1391
    %1409 = vmatpush.bf16.msra.mxu0 %v1400
    %1410 = vmatpush.bf16.msra.mxu0 %v1399
    %1411 = vmatpush.bf16.msra.mxu0 %v1398
    %1412 = vmatpush.bf16.msra.mxu0 %v1397
    %1413 = vmatpush.bf16.msra.mxu0 %v1396
    %1414 = vmatpush.bf16.msra.mxu0 %v1395
    %1415 = vmatpush.bf16.msra.mxu0 %v1394
    %1416 = vmatpush.bf16.msra.mxu0 %v1393
    %1417 = vmatmul.bf16.gmra.mxu0 %v1309
    %v1418 = vpop.f32.mrf.mxu0
    %v1419 = vadd.f32 %v1359, %v1418
    %v1420 = vpop.f32.mrf.mxu0
    %v1421 = vadd.f32 %v1359, %v1420
    %1422 = vmatmul.bf16.gmra.mxu0 %v1310
    %v1423 = vpop.f32.mrf.mxu0
    %v1424 = vadd.f32 %v1359, %v1423
    %v1425 = vpop.f32.mrf.mxu0
    %v1426 = vadd.f32 %v1359, %v1425
    %1427 = vmatmul.bf16.gmra.mxu0 %v1311
    %v1428 = vpop.f32.mrf.mxu0
    %v1429 = vadd.f32 %v1359, %v1428
    %v1430 = vpop.f32.mrf.mxu0
    %v1431 = vadd.f32 %v1359, %v1430
    %1432 = vmatmul.bf16.gmra.mxu0 %v1312
    %v1433 = vpop.f32.mrf.mxu0
    %v1434 = vadd.f32 %v1359, %v1433
    %v1435 = vpop.f32.mrf.mxu0
    %v1436 = vadd.f32 %v1359, %v1435
    %1437 = vmatmul.bf16.gmra.mxu0 %v1313
    %v1438 = vpop.f32.mrf.mxu0
    %v1439 = vadd.f32 %v1359, %v1438
    %v1440 = vpop.f32.mrf.mxu0
    %v1441 = vadd.f32 %v1359, %v1440
    %1442 = vmatmul.bf16.gmra.mxu0 %v1314
    %v1443 = vpop.f32.mrf.mxu0
    %v1444 = vadd.f32 %v1359, %v1443
    %v1445 = vpop.f32.mrf.mxu0
    %v1446 = vadd.f32 %v1359, %v1445
    %1447 = vmatmul.bf16.gmra.mxu0 %v1315
    %v1448 = vpop.f32.mrf.mxu0
    %v1449 = vadd.f32 %v1359, %v1448
    %v1450 = vpop.f32.mrf.mxu0
    %v1451 = vadd.f32 %v1359, %v1450
    %1452 = vmatmul.bf16.gmra.mxu0 %v1316
    %v1453 = vpop.f32.mrf.mxu0
    %v1454 = vadd.f32 %v1359, %v1453
    %v1455 = vpop.f32.mrf.mxu0
    %v1456 = vadd.f32 %v1359, %v1455
    %1457 = vmatmul.bf16.gmra.mxu0 %v1317
    %v1458 = vpop.f32.mrf.mxu0
    %v1459 = vadd.f32 %v1359, %v1458
    %v1460 = vpop.f32.mrf.mxu0
    %v1461 = vadd.f32 %v1359, %v1460
    %1462 = vmatmul.bf16.gmra.mxu0 %v1318
    %v1463 = vpop.f32.mrf.mxu0
    %v1464 = vadd.f32 %v1359, %v1463
    %v1465 = vpop.f32.mrf.mxu0
    %v1466 = vadd.f32 %v1359, %v1465
    %1467 = vmatmul.bf16.gmra.mxu0 %v1319
    %v1468 = vpop.f32.mrf.mxu0
    %v1469 = vadd.f32 %v1359, %v1468
    %v1470 = vpop.f32.mrf.mxu0
    %v1471 = vadd.f32 %v1359, %v1470
    %1472 = vmatmul.bf16.gmra.mxu0 %v1320
    %v1473 = vpop.f32.mrf.mxu0
    %v1474 = vadd.f32 %v1359, %v1473
    %v1475 = vpop.f32.mrf.mxu0
    %v1476 = vadd.f32 %v1359, %v1475
    %1477 = vmatmul.bf16.gmra.mxu0 %v1321
    %v1478 = vpop.f32.mrf.mxu0
    %v1479 = vadd.f32 %v1359, %v1478
    %v1480 = vpop.f32.mrf.mxu0
    %v1481 = vadd.f32 %v1359, %v1480
    %1482 = vmatmul.bf16.gmra.mxu0 %v1322
    %v1483 = vpop.f32.mrf.mxu0
    %v1484 = vadd.f32 %v1359, %v1483
    %v1485 = vpop.f32.mrf.mxu0
    %v1486 = vadd.f32 %v1359, %v1485
    %1487 = vmatmul.bf16.gmra.mxu0 %v1323
    %v1488 = vpop.f32.mrf.mxu0
    %v1489 = vadd.f32 %v1359, %v1488
    %v1490 = vpop.f32.mrf.mxu0
    %v1491 = vadd.f32 %v1359, %v1490
    %1492 = vmatmul.bf16.gmra.mxu0 %v1324
    %v1493 = vpop.f32.mrf.mxu0
    %v1494 = vadd.f32 %v1359, %v1493
    %v1495 = vpop.f32.mrf.mxu0
    %v1496 = vadd.f32 %v1359, %v1495
    %1497 = vmatmul.bf16.gmra.mxu0 %v1325
    %v1498 = vpop.f32.mrf.mxu0
    %v1499 = vadd.f32 %v1359, %v1498
    %v1500 = vpop.f32.mrf.mxu0
    %v1501 = vadd.f32 %v1359, %v1500
    %1502 = vmatmul.bf16.gmra.mxu0 %v1326
    %v1503 = vpop.f32.mrf.mxu0
    %v1504 = vadd.f32 %v1359, %v1503
    %v1505 = vpop.f32.mrf.mxu0
    %v1506 = vadd.f32 %v1359, %v1505
    %1507 = vmatmul.bf16.gmra.mxu0 %v1327
    %v1508 = vpop.f32.mrf.mxu0
    %v1509 = vadd.f32 %v1359, %v1508
    %v1510 = vpop.f32.mrf.mxu0
    %v1511 = vadd.f32 %v1359, %v1510
    %1512 = vmatmul.bf16.gmra.mxu0 %v1328
    %v1513 = vpop.f32.mrf.mxu0
    %v1514 = vadd.f32 %v1359, %v1513
    %v1515 = vpop.f32.mrf.mxu0
    %v1516 = vadd.f32 %v1359, %v1515
    %1517 = vmatmul.bf16.gmra.mxu0 %v1329
    %v1518 = vpop.f32.mrf.mxu0
    %v1519 = vadd.f32 %v1359, %v1518
    %v1520 = vpop.f32.mrf.mxu0
    %v1521 = vadd.f32 %v1359, %v1520
    %1522 = vmatmul.bf16.gmra.mxu0 %v1330
    %v1523 = vpop.f32.mrf.mxu0
    %v1524 = vadd.f32 %v1359, %v1523
    %v1525 = vpop.f32.mrf.mxu0
    %v1526 = vadd.f32 %v1359, %v1525
    %1527 = vmatmul.bf16.gmra.mxu0 %v1331
    %v1528 = vpop.f32.mrf.mxu0
    %v1529 = vadd.f32 %v1359, %v1528
    %v1530 = vpop.f32.mrf.mxu0
    %v1531 = vadd.f32 %v1359, %v1530
    %1532 = vmatmul.bf16.gmra.mxu0 %v1332
    %v1533 = vpop.f32.mrf.mxu0
    %v1534 = vadd.f32 %v1359, %v1533
    %v1535 = vpop.f32.mrf.mxu0
    %v1536 = vadd.f32 %v1359, %v1535
    %1537 = vmatmul.bf16.gmra.mxu0 %v1333
    %v1538 = vpop.f32.mrf.mxu0
    %v1539 = vadd.f32 %v1359, %v1538
    %v1540 = vpop.f32.mrf.mxu0
    %v1541 = vadd.f32 %v1359, %v1540
    %1542 = vmatmul.bf16.gmra.mxu0 %v1334
    %v1543 = vpop.f32.mrf.mxu0
    %v1544 = vadd.f32 %v1359, %v1543
    %v1545 = vpop.f32.mrf.mxu0
    %v1546 = vadd.f32 %v1359, %v1545
    %1547 = vmatmul.bf16.gmra.mxu0 %v1335
    %v1548 = vpop.f32.mrf.mxu0
    %v1549 = vadd.f32 %v1359, %v1548
    %v1550 = vpop.f32.mrf.mxu0
    %v1551 = vadd.f32 %v1359, %v1550
    %1552 = vmatmul.bf16.gmra.mxu0 %v1336
    %v1553 = vpop.f32.mrf.mxu0
    %v1554 = vadd.f32 %v1359, %v1553
    %v1555 = vpop.f32.mrf.mxu0
    %v1556 = vadd.f32 %v1359, %v1555
    %1557 = vmatmul.bf16.gmra.mxu0 %v1337
    %v1558 = vpop.f32.mrf.mxu0
    %v1559 = vadd.f32 %v1359, %v1558
    %v1560 = vpop.f32.mrf.mxu0
    %v1561 = vadd.f32 %v1359, %v1560
    %1562 = vmatmul.bf16.gmra.mxu0 %v1338
    %v1563 = vpop.f32.mrf.mxu0
    %v1564 = vadd.f32 %v1359, %v1563
    %v1565 = vpop.f32.mrf.mxu0
    %v1566 = vadd.f32 %v1359, %v1565
    %1567 = vmatmul.bf16.gmra.mxu0 %v1339
    %v1568 = vpop.f32.mrf.mxu0
    %v1569 = vadd.f32 %v1359, %v1568
    %v1570 = vpop.f32.mrf.mxu0
    %v1571 = vadd.f32 %v1359, %v1570
    %1572 = vmatmul.bf16.gmra.mxu0 %v1340
    %v1573 = vpop.f32.mrf.mxu0
    %v1574 = vadd.f32 %v1359, %v1573
    %v1575 = vpop.f32.mrf.mxu0
    %v1576 = vadd.f32 %v1359, %v1575
    %1577 = vdwg.mxu0
    %1578 = vst [vmem:[#allocation2] sm:$0xff] %v1419
    %1579 = vst [vmem:[#allocation2 + $0x8] sm:$0xff] %v1421
    %1580 = vst [vmem:[#allocation2 + $0x10] sm:$0xff] %v1424
    %1581 = vst [vmem:[#allocation2 + $0x18] sm:$0xff] %v1426
    %1582 = vst [vmem:[#allocation2 + $0x20] sm:$0xff] %v1429
    %1583 = vst [vmem:[#allocation2 + $0x28] sm:$0xff] %v1431
    %1584 = vst [vmem:[#allocation2 + $0x30] sm:$0xff] %v1434
    %1585 = vst [vmem:[#allocation2 + $0x38] sm:$0xff] %v1436
    %1586 = vst [vmem:[#allocation2 + $0x40] sm:$0xff] %v1439
    %1587 = vst [vmem:[#allocation2 + $0x48] sm:$0xff] %v1441
    %1588 = vst [vmem:[#allocation2 + $0x50] sm:$0xff] %v1444
    %1589 = vst [vmem:[#allocation2 + $0x58] sm:$0xff] %v1446
    %1590 = vst [vmem:[#allocation2 + $0x60] sm:$0xff] %v1449
    %1591 = vst [vmem:[#allocation2 + $0x68] sm:$0xff] %v1451
    %1592 = vst [vmem:[#allocation2 + $0x70] sm:$0xff] %v1454
    %1593 = vst [vmem:[#allocation2 + $0x78] sm:$0xff] %v1456
    %1594 = vst [vmem:[#allocation2 + $0x80] sm:$0xff] %v1459
    %1595 = vst [vmem:[#allocation2 + $0x88] sm:$0xff] %v1461
    %1596 = vst [vmem:[#allocation2 + $0x90] sm:$0xff] %v1464
    %1597 = vst [vmem:[#allocation2 + $0x98] sm:$0xff] %v1466
    %1598 = vst [vmem:[#allocation2 + $0xa0] sm:$0xff] %v1469
    %1599 = vst [vmem:[#allocation2 + $0xa8] sm:$0xff] %v1471
    %1600 = vst [vmem:[#allocation2 + $0xb0] sm:$0xff] %v1474
    %1601 = vst [vmem:[#allocation2 + $0xb8] sm:$0xff] %v1476
    %1602 = vst [vmem:[#allocation2 + $0xc0] sm:$0xff] %v1479
    %1603 = vst [vmem:[#allocation2 + $0xc8] sm:$0xff] %v1481
    %1604 = vst [vmem:[#allocation2 + $0xd0] sm:$0xff] %v1484
    %1605 = vst [vmem:[#allocation2 + $0xd8] sm:$0xff] %v1486
    %1606 = vst [vmem:[#allocation2 + $0xe0] sm:$0xff] %v1489
    %1607 = vst [vmem:[#allocation2 + $0xe8] sm:$0xff] %v1491
    %1608 = vst [vmem:[#allocation2 + $0xf0] sm:$0xff] %v1494
    %1609 = vst [vmem:[#allocation2 + $0xf8] sm:$0xff] %v1496
    %1610 = vst [vmem:[#allocation2 + $0x100] sm:$0xff] %v1499
    %1611 = vst [vmem:[#allocation2 + $0x108] sm:$0xff] %v1501
    %1612 = vst [vmem:[#allocation2 + $0x110] sm:$0xff] %v1504
    %1613 = vst [vmem:[#allocation2 + $0x118] sm:$0xff] %v1506
    %1614 = vst [vmem:[#allocation2 + $0x120] sm:$0xff] %v1509
    %1615 = vst [vmem:[#allocation2 + $0x128] sm:$0xff] %v1511
    %1616 = vst [vmem:[#allocation2 + $0x130] sm:$0xff] %v1514
    %1617 = vst [vmem:[#allocation2 + $0x138] sm:$0xff] %v1516
    %1618 = vst [vmem:[#allocation2 + $0x140] sm:$0xff] %v1519
    %1619 = vst [vmem:[#allocation2 + $0x148] sm:$0xff] %v1521
    %1620 = vst [vmem:[#allocation2 + $0x150] sm:$0xff] %v1524
    %1621 = vst [vmem:[#allocation2 + $0x158] sm:$0xff] %v1526
    %1622 = vst [vmem:[#allocation2 + $0x160] sm:$0xff] %v1529
    %1623 = vst [vmem:[#allocation2 + $0x168] sm:$0xff] %v1531
    %1624 = vst [vmem:[#allocation2 + $0x170] sm:$0xff] %v1534
    %1625 = vst [vmem:[#allocation2 + $0x178] sm:$0xff] %v1536
    %1626 = vst [vmem:[#allocation2 + $0x180] sm:$0xff] %v1539
    %1627 = vst [vmem:[#allocation2 + $0x188] sm:$0xff] %v1541
    %1628 = vst [vmem:[#allocation2 + $0x190] sm:$0xff] %v1544
    %1629 = vst [vmem:[#allocation2 + $0x198] sm:$0xff] %v1546
    %1630 = vst [vmem:[#allocation2 + $0x1a0] sm:$0xff] %v1549
    %1631 = vst [vmem:[#allocation2 + $0x1a8] sm:$0xff] %v1551
    %1632 = vst [vmem:[#allocation2 + $0x1b0] sm:$0xff] %v1554
    %1633 = vst [vmem:[#allocation2 + $0x1b8] sm:$0xff] %v1556
    %1634 = vst [vmem:[#allocation2 + $0x1c0] sm:$0xff] %v1559
    %1635 = vst [vmem:[#allocation2 + $0x1c8] sm:$0xff] %v1561
    %1636 = vst [vmem:[#allocation2 + $0x1d0] sm:$0xff] %v1564
    %1637 = vst [vmem:[#allocation2 + $0x1d8] sm:$0xff] %v1566
    %1638 = vst [vmem:[#allocation2 + $0x1e0] sm:$0xff] %v1569
    %1639 = vst [vmem:[#allocation2 + $0x1e8] sm:$0xff] %v1571
    %1640 = vst [vmem:[#allocation2 + $0x1f0] sm:$0xff] %v1574
    %1641 = vst [vmem:[#allocation2 + $0x1f8] sm:$0xff] %v1576
    // Predicated region
    $region18: #{tpu_custom_call.1} parent=1 // pred_check
      _
    $region19: #{tpu_custom_call.1} parent=1 // pred_check_branch
      %1643 = sbr.rel (0) target = $region21
    $region20: #{tpu_custom_call.1} parent=1 // pred_region
      %1645 = vsyncadd [#allocation3], 0
      %s1646 = sshll.u32 [#allocation2], 4
      %s1647 = int_to_ptr.vmem [resolvable:$true] %s1646
      %s1648 = sshll.u32 %s4, 4
      %s1649 = int_to_ptr.hbm [resolvable:$true] %s1648
      %1654 = dma.vmem_to_hbm [thread:$0]  %s1647, 8192, %s1649, [#allocation3], 128, 128, 8
    $region21: #{tpu_custom_call.1} parent=1 // pred_fallthru
      _
    // Predicated region
    $region22: #{tpu_custom_call.1} parent=1 // pred_check
      _
    $region23: #{tpu_custom_call.1} parent=1 // pred_check_branch
      %1656 = sbr.rel (0) target = $region25
    $region24: #{tpu_custom_call.1} parent=1 // pred_region
      %1658 = dma.done [#allocation3], 8192
    $region25: #{tpu_custom_call.1} parent=1 // pred_fallthru
      _
    %1659 = vsyncpa [#allocation3], 1

</llo_original>
